<compile_context>
chip_gen: v7x
topology: tpu7x:2x2x1
jax: 0.10.0
libtpu: 0.0.40
codegen_flags: <defaults>
</compile_context>

<pallas_src>
import functools

import jax
import jax.numpy as jnp
from jax import lax
from jax.experimental import pallas as pl
from jax.experimental.pallas import tpu as pltpu

_NEG_SLOPE = 0.2
_MASK_BIAS = -1e30
# Graphs up to this many nodes use the fused 2-layer kernel (the [N, N] adjacency
# bias and score temporaries comfortably fit the 32 MiB scoped-VMEM default).
_FUSE_MAX_N = 1024


def _round_up(x, m):
    return (x + m - 1) // m * m


# --------------------------------------------------------------------------- #
# Shared per-layer GAT math (operates on VMEM-resident values inside a kernel).
# --------------------------------------------------------------------------- #
def _gat_heads(xw_bf, alphas_dst, alphas_src_t, adj_bias, heads, out_ch):
    """Per-head attention + aggregation.

    xw_bf        : [Ns, H*C]  bf16   linearly transformed source features
    alphas_dst   : [TM, >=H]  f32    per-destination-node attention terms
    alphas_src_t : [>=H, Ns]  f32    per-source-node attention terms (lane-major)
    adj_bias     : [TM, Ns]   f32    0 on edges (self loops incl.), -1e30 elsewhere
    Returns a list of [TM, C] f32 head outputs (softmax-normalized).
    """
    ns = xw_bf.shape[0]
    ones_col = jnp.ones((ns, 1), jnp.bfloat16)
    outs = []
    for h in range(heads):                        # heads is small & static
        # e[i, j] = LeakyReLU(alpha_dst[i] + alpha_src[j]) + mask_bias[i, j]
        e = alphas_dst[:, h:h + 1] + alphas_src_t[h:h + 1, :]
        e = jnp.maximum(e, _NEG_SLOPE * e) + adj_bias
        m = jnp.max(e, axis=1, keepdims=True)
        # exp kept in f32 (v5e has no bf16 EUP); masked entries underflow to 0.
        p = jnp.exp(e - m).astype(jnp.bfloat16)
        # Fold the softmax denominator into the aggregation matmul via a ones
        # column (f32 MXU accumulation), then normalize the small [TM, C] result.
        xh1 = jnp.concatenate(
            [xw_bf[:, h * out_ch:(h + 1) * out_ch], ones_col], axis=1)
        agg_d = jnp.dot(p, xh1, preferred_element_type=jnp.float32)
        inv = pl.reciprocal(agg_d[:, out_ch:out_ch + 1], approx=True)
        outs.append(agg_d[:, :out_ch] * inv)
    return outs


def _combine_heads(head_outs, bias, concat, heads):
    if concat:
        out = jnp.concatenate(head_outs, axis=1)
    else:
        out = head_outs[0]
        for ho in head_outs[1:]:
            out = out + ho
        out = out * (1.0 / heads)
    return out + bias


def _elu(x):
    # ELU(alpha=1): x if x>0 else exp(x)-1 (clamp the discarded branch).
    return jnp.where(x > 0, x, jnp.exp(jnp.minimum(x, 0.0)) - 1.0)


def _pad_lanes(x, width):
    pad = width - x.shape[1]
    if pad:
        x = jnp.concatenate([x, jnp.zeros((x.shape[0], pad), x.dtype)], axis=1)
    return x


# --------------------------------------------------------------------------- #
# Fused 2-layer kernel (small graphs, grid = 1).
# --------------------------------------------------------------------------- #
def _gat_gen_fused_kernel(x_ref, adjb_ref, w0_ref, asrc0_ref, adst0_ref, b0_ref,
                          w1_ref, asrc1_ref, adst1_ref, b1_ref, out_ref,
                          *, heads, hid_ch, out_ch):
    adj_bias = adjb_ref[...].astype(jnp.float32)                  # [N, N]

    def alphas(xw_bf, asrc_t_ref, adst_ref):
        # src alphas produced directly lane-major [8, N] (contract on lanes),
        # dst alphas as a standard [N, 8] MXU dot — no XLU reductions.
        a_src_t = lax.dot_general(asrc_t_ref[...], xw_bf,
                                  (((1,), (1,)), ((), ())),
                                  preferred_element_type=jnp.float32)
        a_dst = jnp.dot(xw_bf, adst_ref[...],
                        preferred_element_type=jnp.float32)
        return a_dst, a_src_t

    # ---- Layer 0: GATConv(in, hid, heads, concat=True) + ELU ----------------
    xw0 = jnp.dot(x_ref[...], w0_ref[...],
                  preferred_element_type=jnp.float32).astype(jnp.bfloat16)
    a_dst0, a_src0 = alphas(xw0, asrc0_ref, adst0_ref)
    h = _combine_heads(_gat_heads(xw0, a_dst0, a_src0, adj_bias, heads, hid_ch),
                       b0_ref[...], concat=True, heads=heads)
    h = _elu(h)

    # ---- Layer 1: GATConv(hid*heads, out, heads, concat=False) --------------
    xw1 = jnp.dot(h.astype(jnp.bfloat16), w1_ref[...],
                  preferred_element_type=jnp.float32).astype(jnp.bfloat16)
    a_dst1, a_src1 = alphas(xw1, asrc1_ref, adst1_ref)
    out = _combine_heads(_gat_heads(xw1, a_dst1, a_src1, adj_bias, heads, out_ch),
                         b1_ref[...], concat=False, heads=heads)

    out_ref[...] = _pad_lanes(out, out_ref.shape[1]).astype(out_ref.dtype)


def gat_gen_fused(params, x, adj_bias, *, hidden_channels, out_channels, heads):
    n, _ = x.shape
    out_pad = _round_up(out_channels, 128)
    args = (
        x.astype(jnp.bfloat16),
        adj_bias,
        params["w0"].astype(jnp.bfloat16),
        params["asrc0"].astype(jnp.bfloat16),
        params["adst0"].astype(jnp.bfloat16),
        params["b0"].astype(jnp.float32),
        params["w1"].astype(jnp.bfloat16),
        params["asrc1"].astype(jnp.bfloat16),
        params["adst1"].astype(jnp.bfloat16),
        params["b1"].astype(jnp.float32),
    )
    kernel = functools.partial(_gat_gen_fused_kernel, heads=heads,
                               hid_ch=hidden_channels, out_ch=out_channels)
    out = pl.pallas_call(
        kernel,
        out_shape=jax.ShapeDtypeStruct((n, out_pad), jnp.float32),
        grid=(1,),
        in_specs=[pl.BlockSpec(a.shape, lambda i: (0, 0)) for a in args],
        out_specs=pl.BlockSpec((n, out_pad), lambda i: (0, 0)),
    )(*args)
    return out[:, :out_channels]


# --------------------------------------------------------------------------- #
# Per-layer tiled kernel (large graphs): x@W and all alphas hoisted out of the
# grid; kernel only does per-tile score / softmax / aggregation.
# --------------------------------------------------------------------------- #
def _gat_conv_tiled_kernel(xw_ref, adst_ref, asrct_ref, adjb_ref, bias_ref,
                           out_ref, *, heads, out_ch, concat, apply_elu):
    adj_bias = adjb_ref[...].astype(jnp.float32)                  # [TM, N]
    outs = _gat_heads(xw_ref[...], adst_ref[...], asrct_ref[...],
                      adj_bias, heads, out_ch)
    out = _combine_heads(outs, bias_ref[...], concat=concat, heads=heads)
    if apply_elu:
        out = _elu(out)
    out_ref[...] = _pad_lanes(out, out_ref.shape[1]).astype(out_ref.dtype)


def _pick_row_tile(n):
    """Destination-row tile size (must divide N).

    Small graphs run as a single tile (grid=1 — a forced split is pure per-step
    overhead on single-TensorCore v5e/v6e).  Large graphs use 128-row tiles,
    which bounds the [TM, N] temporaries / double-buffered adj-bias block so the
    pipeline still fits v7x's 64 MiB VMEM.
    """
    if n <= 256:
        return n
    for cand in (128, 64, 32, 16, 8):
        if n % cand == 0:
            return cand
    return n


def gat_conv_tiled(xw_bf, a_src_t, a_dst, bias, adj_bias, *, heads, out_ch,
                   concat, apply_elu, out_dtype=jnp.float32, tm=None):
    """One GATConv layer on pre-transformed features, tiled over dst rows.

    Returns [N, round_up(out_dim, 128)] (zero-padded lanes, unmasked stores)."""
    n, hc = xw_bf.shape
    assert hc == heads * out_ch, (hc, heads, out_ch)
    out_dim = heads * out_ch if concat else out_ch
    out_pad = _round_up(out_dim, 128)
    if tm is None:
        tm = _pick_row_tile(n)
    assert n % tm == 0, (n, tm)

    # Hoisted out of the grid: per-node attention terms for all N nodes (tiny
    # MXU dots, f32).  alphas_src is produced lane-major so the kernel never
    # transposes an N-length vector.
    alphas_dst = jnp.dot(xw_bf, a_dst.astype(jnp.bfloat16),
                         preferred_element_type=jnp.float32)       # [N, 8]
    alphas_src_t = lax.dot_general(a_src_t.astype(jnp.bfloat16), xw_bf,
                                   (((1,), (1,)), ((), ())),
                                   preferred_element_type=jnp.float32)  # [8, N]

    kernel = functools.partial(_gat_conv_tiled_kernel, heads=heads,
                               out_ch=out_ch, concat=concat, apply_elu=apply_elu)
    # TODO(synk): for very large N, add a second ("arbitrary") grid axis over
    # source columns with flash-style online softmax so the [TM, N] temporaries
    # and the adj-bias stream become [TM, TK] blocks.
    return pl.pallas_call(
        kernel,
        out_shape=jax.ShapeDtypeStruct((n, out_pad), out_dtype),
        grid=(n // tm,),
        in_specs=[
            pl.BlockSpec((n, hc), lambda i: (0, 0)),               # xw (all src rows)
            pl.BlockSpec((tm, alphas_dst.shape[1]), lambda i: (i, 0)),
            pl.BlockSpec(alphas_src_t.shape, lambda i: (0, 0)),
            pl.BlockSpec((tm, n), lambda i: (i, 0)),               # adj-bias tile
            pl.BlockSpec(bias.shape, lambda i: (0, 0)),
        ],
        out_specs=pl.BlockSpec((tm, out_pad), lambda i: (i, 0)),
        compiler_params=pltpu.CompilerParams(
            dimension_semantics=("parallel",)),
    )(xw_bf, alphas_dst, alphas_src_t, adj_bias, bias.astype(jnp.float32))


def gat_gen_tiled(params, x, adj_bias, *, hidden_channels, out_channels, heads,
                  tm=None):
    """Per-layer tiled path for graphs too large for the fused kernel."""
    hc0 = heads * hidden_channels
    # Hoisted linear transforms (once per layer, not per tile).
    xw0 = jnp.dot(x.astype(jnp.bfloat16), params["w0"].astype(jnp.bfloat16),
                  preferred_element_type=jnp.float32).astype(jnp.bfloat16)
    h = gat_conv_tiled(xw0, params["asrc0"], params["adst0"], params["b0"],
                       adj_bias, heads=heads, out_ch=hidden_channels,
                       concat=True, apply_elu=True, out_dtype=jnp.bfloat16,
                       tm=tm)
    xw1 = jnp.dot(h[:, :hc0], params["w1"].astype(jnp.bfloat16),
                  preferred_element_type=jnp.float32).astype(jnp.bfloat16)
    out = gat_conv_tiled(xw1, params["asrc1"], params["adst1"], params["b1"],
                         adj_bias, heads=heads, out_ch=out_channels,
                         concat=False, apply_elu=False, out_dtype=jnp.float32,
                         tm=tm)
    return out[:, :out_channels]


def gat_gen_forward(params, x, adj, *, hidden_channels, out_channels, heads):
    """GAT_gen forward: GATConv(concat=True) -> ELU -> GATConv(concat=False)."""
    # Edge mask as an additive bias: 0 on edges (self loops included), -1e30 off.
    adj_bias = jnp.where(adj > 0, 0.0, _MASK_BIAS).astype(jnp.bfloat16)
    if x.shape[0] <= _FUSE_MAX_N:
        return gat_gen_fused(params, x, adj_bias,
                             hidden_channels=hidden_channels,
                             out_channels=out_channels, heads=heads)
    return gat_gen_tiled(params, x, adj_bias, hidden_channels=hidden_channels,
                         out_channels=out_channels, heads=heads)


# --------------------------------------------------------------------------- #
# Parameters / graph helpers.
# --------------------------------------------------------------------------- #
def glorot(key, shape):
    fan_in, fan_out = shape[-2], shape[-1]
    a = jnp.sqrt(6.0 / (fan_in + fan_out))
    return jax.random.uniform(key, shape, jnp.float32, minval=-a, maxval=a)


def pack_att_src_t(att_src, pad_rows=8):
    """[H, C] -> lane-major [pad_rows, H*C]; row h holds att_src[h] in its block."""
    heads, c = att_src.shape
    a = jnp.zeros((pad_rows, heads * c), jnp.float32)
    for h in range(heads):
        a = a.at[h, h * c:(h + 1) * c].set(att_src[h])
    return a


def pack_att_dst(att_dst, pad_cols=8):
    """[H, C] -> [H*C, pad_cols]; column h holds att_dst[h] in its block."""
    heads, c = att_dst.shape
    a = jnp.zeros((heads * c, pad_cols), jnp.float32)
    for h in range(heads):
        a = a.at[h * c:(h + 1) * c, h].set(att_dst[h])
    return a


def init_gat_gen_params(key, in_channels, hidden_channels, out_channels, heads):
    """Deterministic parameter init matching GAT_gen(num_layers=2) shapes."""
    ks = jax.random.split(key, 6)
    as0 = glorot(ks[1], (heads, hidden_channels))
    ad0 = glorot(ks[2], (heads, hidden_channels))
    as1 = glorot(ks[4], (heads, out_channels))
    ad1 = glorot(ks[5], (heads, out_channels))
    return {
        # layer 0: GATConv(in, hidden, heads, concat=True)
        "w0": glorot(ks[0], (in_channels, heads * hidden_channels)),
        "asrc0": pack_att_src_t(as0),
        "adst0": pack_att_dst(ad0),
        "b0": jnp.zeros((1, heads * hidden_channels), jnp.float32),
        # layer 1: GATConv(hidden*heads, out, heads, concat=False)
        "w1": glorot(ks[3], (heads * hidden_channels, heads * out_channels)),
        "asrc1": pack_att_src_t(as1),
        "adst1": pack_att_dst(ad1),
        "b1": jnp.zeros((1, out_channels), jnp.float32),
    }


def edge_index_to_adj(edge_index, num_nodes):
    """adj[i, j] = 1 iff edge j -> i; self-loops added (GATConv default)."""
    src, dst = edge_index[0], edge_index[1]
    adj = jnp.zeros((num_nodes, num_nodes), jnp.float32)
    adj = adj.at[dst, src].set(1.0)
    adj = adj + jnp.eye(num_nodes, dtype=jnp.float32)
    return jnp.minimum(adj, 1.0)


if __name__ == "__main__":
    key = jax.random.PRNGKey(0)
    k_x, k_e, k_p = jax.random.split(key, 3)

    # Small GNN problem: 64 nodes, 8 input features, hidden 16, out 8, 2 heads.
    N, IN_CH, HID_CH, OUT_CH, HEADS = 64, 8, 16, 8, 2
    E = 256

    x = jax.random.normal(k_x, (N, IN_CH), jnp.float32)
    edge_index = jax.random.randint(k_e, (2, E), 0, N, jnp.int32)
    adj = edge_index_to_adj(edge_index, N)
    params = init_gat_gen_params(k_p, IN_CH, HID_CH, OUT_CH, HEADS)

    # Primary path: fused 2-layer kernel (single pallas_call, grid=1).
    out = gat_gen_forward(params, x, adj, hidden_channels=HID_CH,
                          out_channels=OUT_CH, heads=HEADS)
    out = jax.block_until_ready(out)
    assert out.shape == (N, OUT_CH), out.shape
    assert bool(jnp.all(jnp.isfinite(out)))

    # Self-check: per-layer tiled path (forced grid of 2 row tiles) agrees with
    # the fused path within bf16/approx-reciprocal drift.
    adj_bias = jnp.where(adj > 0, 0.0, _MASK_BIAS).astype(jnp.bfloat16)
    out_tiled = gat_gen_tiled(params, x, adj_bias, hidden_channels=HID_CH,
                              out_channels=OUT_CH, heads=HEADS, tm=N // 2)
    out_tiled = jax.block_until_ready(out_tiled)
    assert out_tiled.shape == (N, OUT_CH), out_tiled.shape
    assert bool(jnp.all(jnp.isfinite(out_tiled)))
    max_diff = float(jnp.max(jnp.abs(out - out_tiled)))
    assert max_diff < 1e-1, ("fused vs tiled mismatch", max_diff)

    print("KERNEL_OK")
</pallas_src>

<mosaic_0001>
module attributes {stable_mosaic.version = 11 : i64} {
  func.func @_gat_gen_fused_kernel(%arg0: i32, %arg1: memref<64x8xbf16, #tpu.memory_space<vmem>>, %arg2: memref<64x64xbf16, #tpu.memory_space<vmem>>, %arg3: memref<8x32xbf16, #tpu.memory_space<vmem>>, %arg4: memref<8x32xbf16, #tpu.memory_space<vmem>>, %arg5: memref<32x8xbf16, #tpu.memory_space<vmem>>, %arg6: memref<1x32xf32, #tpu.memory_space<vmem>>, %arg7: memref<32x16xbf16, #tpu.memory_space<vmem>>, %arg8: memref<8x16xbf16, #tpu.memory_space<vmem>>, %arg9: memref<16x8xbf16, #tpu.memory_space<vmem>>, %arg10: memref<1x8xf32, #tpu.memory_space<vmem>>, %arg11: memref<64x128xf32, #tpu.memory_space<vmem>>) attributes {dimension_semantics = [#tpu.dimension_semantics<arbitrary>], iteration_bounds = array<i64: 1>, scalar_prefetch = 0 : i64, scratch_operands = 0 : i64, tpu.core_type = #tpu.core_type<tc>, window_params = [{pipeline_mode = #tpu.pipeline_mode<synchronous>, transform_indices = @transform_0, window_bounds = array<i64: 64, 8>}, {pipeline_mode = #tpu.pipeline_mode<synchronous>, transform_indices = @transform_1, window_bounds = array<i64: 64, 64>}, {pipeline_mode = #tpu.pipeline_mode<synchronous>, transform_indices = @transform_2, window_bounds = array<i64: 8, 32>}, {pipeline_mode = #tpu.pipeline_mode<synchronous>, transform_indices = @transform_3, window_bounds = array<i64: 8, 32>}, {pipeline_mode = #tpu.pipeline_mode<synchronous>, transform_indices = @transform_4, window_bounds = array<i64: 32, 8>}, {pipeline_mode = #tpu.pipeline_mode<synchronous>, transform_indices = @transform_5, window_bounds = array<i64: 1, 32>}, {pipeline_mode = #tpu.pipeline_mode<synchronous>, transform_indices = @transform_6, window_bounds = array<i64: 32, 16>}, {pipeline_mode = #tpu.pipeline_mode<synchronous>, transform_indices = @transform_7, window_bounds = array<i64: 8, 16>}, {pipeline_mode = #tpu.pipeline_mode<synchronous>, transform_indices = @transform_8, window_bounds = array<i64: 16, 8>}, {pipeline_mode = #tpu.pipeline_mode<synchronous>, transform_indices = @transform_9, window_bounds = array<i64: 1, 8>}, {pipeline_mode = #tpu.pipeline_mode<synchronous>, transform_indices = @transform_10, window_bounds = array<i64: 64, 128>}]} {
    %c0 = arith.constant 0 : index
    %c0_0 = arith.constant 0 : index
    %0 = vector.load %arg2[%c0, %c0_0] : memref<64x64xbf16, #tpu.memory_space<vmem>>, vector<64x64xbf16>
    %1 = arith.extf %0 : vector<64x64xbf16> to vector<64x64xf32>
    %c0_1 = arith.constant 0 : index
    %c0_2 = arith.constant 0 : index
    %2 = vector.load %arg1[%c0_1, %c0_2] : memref<64x8xbf16, #tpu.memory_space<vmem>>, vector<64x8xbf16>
    %c0_3 = arith.constant 0 : index
    %c0_4 = arith.constant 0 : index
    %3 = vector.load %arg3[%c0_3, %c0_4] : memref<8x32xbf16, #tpu.memory_space<vmem>>, vector<8x32xbf16>
    %cst = arith.constant dense<0.000000e+00> : vector<64x32xf32>
    %4 = tpu.matmul %2, %3, %cst {dimension_numbers = #tpu.dot_dimension_numbers<[1], [0], [0], [1], [0, 0, 1, 1], [], []>} : vector<64x8xbf16>, vector<8x32xbf16>, vector<64x32xf32> -> vector<64x32xf32>
    %5 = arith.truncf %4 : vector<64x32xf32> to vector<64x32xbf16>
    %c0_5 = arith.constant 0 : index
    %c0_6 = arith.constant 0 : index
    %6 = vector.load %arg4[%c0_5, %c0_6] : memref<8x32xbf16, #tpu.memory_space<vmem>>, vector<8x32xbf16>
    %cst_7 = arith.constant dense<0.000000e+00> : vector<8x64xf32>
    %7 = tpu.matmul %6, %5, %cst_7 {dimension_numbers = #tpu.dot_dimension_numbers<[1], [1], [0], [0], [0, 0, 1, 0], [], []>} : vector<8x32xbf16>, vector<64x32xbf16>, vector<8x64xf32> -> vector<8x64xf32>
    %c0_8 = arith.constant 0 : index
    %c0_9 = arith.constant 0 : index
    %8 = vector.load %arg5[%c0_8, %c0_9] : memref<32x8xbf16, #tpu.memory_space<vmem>>, vector<32x8xbf16>
    %cst_10 = arith.constant dense<0.000000e+00> : vector<64x8xf32>
    %9 = tpu.matmul %5, %8, %cst_10 {dimension_numbers = #tpu.dot_dimension_numbers<[1], [0], [0], [1], [0, 0, 1, 1], [], []>} : vector<64x32xbf16>, vector<32x8xbf16>, vector<64x8xf32> -> vector<64x8xf32>
    %cst_11 = arith.constant 1.000000e+00 : bf16
    %10 = vector.broadcast %cst_11 : bf16 to vector<64x1xbf16>
    %11 = vector.extract_strided_slice %9 {offsets = [0, 0], sizes = [64, 1], strides = [1, 1]} : vector<64x8xf32> to vector<64x1xf32>
    %12 = vector.extract_strided_slice %7 {offsets = [0, 0], sizes = [1, 64], strides = [1, 1]} : vector<8x64xf32> to vector<1x64xf32>
    %13 = vector.broadcast %11 : vector<64x1xf32> to vector<64x64xf32>
    %14 = vector.broadcast %12 : vector<1x64xf32> to vector<64x64xf32>
    %15 = arith.addf %13, %14 : vector<64x64xf32>
    %cst_12 = arith.constant 2.000000e-01 : f32
    %16 = vector.broadcast %cst_12 : f32 to vector<64x64xf32>
    %17 = arith.mulf %16, %15 : vector<64x64xf32>
    %18 = arith.maximumf %15, %17 : vector<64x64xf32>
    %19 = arith.addf %18, %1 : vector<64x64xf32>
    %cst_13 = arith.constant dense<0xFF800000> : vector<64xf32>
    %20 = vector.multi_reduction <maximumf>, %19, %cst_13 [1] : vector<64x64xf32> to vector<64xf32>
    %21 = vector.shape_cast %20 : vector<64xf32> to vector<64x1xf32>
    %22 = vector.broadcast %21 : vector<64x1xf32> to vector<64x64xf32>
    %23 = arith.subf %19, %22 : vector<64x64xf32>
    %24 = math.exp %23 : vector<64x64xf32>
    %25 = arith.truncf %24 : vector<64x64xf32> to vector<64x64xbf16>
    %26 = vector.extract_strided_slice %5 {offsets = [0, 0], sizes = [64, 16], strides = [1, 1]} : vector<64x32xbf16> to vector<64x16xbf16>
    %27 = tpu.concatenate %26, %10 in 1 : vector<64x16xbf16>, vector<64x1xbf16> -> vector<64x17xbf16>
    %cst_14 = arith.constant dense<0.000000e+00> : vector<64x17xf32>
    %28 = tpu.matmul %25, %27, %cst_14 {dimension_numbers = #tpu.dot_dimension_numbers<[1], [0], [0], [1], [0, 0, 1, 1], [], []>} : vector<64x64xbf16>, vector<64x17xbf16>, vector<64x17xf32> -> vector<64x17xf32>
    %29 = vector.extract_strided_slice %28 {offsets = [0, 16], sizes = [64, 1], strides = [1, 1]} : vector<64x17xf32> to vector<64x1xf32>
    %30 = tpu.reciprocal %29 {approx = true} : vector<64x1xf32> -> vector<64x1xf32>
    %31 = vector.extract_strided_slice %28 {offsets = [0, 0], sizes = [64, 16], strides = [1, 1]} : vector<64x17xf32> to vector<64x16xf32>
    %32 = vector.broadcast %30 : vector<64x1xf32> to vector<64x16xf32>
    %33 = arith.mulf %31, %32 : vector<64x16xf32>
    %34 = vector.extract_strided_slice %9 {offsets = [0, 1], sizes = [64, 1], strides = [1, 1]} : vector<64x8xf32> to vector<64x1xf32>
    %35 = vector.extract_strided_slice %7 {offsets = [1, 0], sizes = [1, 64], strides = [1, 1]} : vector<8x64xf32> to vector<1x64xf32>
    %36 = vector.broadcast %34 : vector<64x1xf32> to vector<64x64xf32>
    %37 = vector.broadcast %35 : vector<1x64xf32> to vector<64x64xf32>
    %38 = arith.addf %36, %37 : vector<64x64xf32>
    %cst_15 = arith.constant 2.000000e-01 : f32
    %39 = vector.broadcast %cst_15 : f32 to vector<64x64xf32>
    %40 = arith.mulf %39, %38 : vector<64x64xf32>
    %41 = arith.maximumf %38, %40 : vector<64x64xf32>
    %42 = arith.addf %41, %1 : vector<64x64xf32>
    %cst_16 = arith.constant dense<0xFF800000> : vector<64xf32>
    %43 = vector.multi_reduction <maximumf>, %42, %cst_16 [1] : vector<64x64xf32> to vector<64xf32>
    %44 = vector.shape_cast %43 : vector<64xf32> to vector<64x1xf32>
    %45 = vector.broadcast %44 : vector<64x1xf32> to vector<64x64xf32>
    %46 = arith.subf %42, %45 : vector<64x64xf32>
    %47 = math.exp %46 : vector<64x64xf32>
    %48 = arith.truncf %47 : vector<64x64xf32> to vector<64x64xbf16>
    %49 = vector.extract_strided_slice %5 {offsets = [0, 16], sizes = [64, 16], strides = [1, 1]} : vector<64x32xbf16> to vector<64x16xbf16>
    %50 = tpu.concatenate %49, %10 in 1 : vector<64x16xbf16>, vector<64x1xbf16> -> vector<64x17xbf16>
    %cst_17 = arith.constant dense<0.000000e+00> : vector<64x17xf32>
    %51 = tpu.matmul %48, %50, %cst_17 {dimension_numbers = #tpu.dot_dimension_numbers<[1], [0], [0], [1], [0, 0, 1, 1], [], []>} : vector<64x64xbf16>, vector<64x17xbf16>, vector<64x17xf32> -> vector<64x17xf32>
    %52 = vector.extract_strided_slice %51 {offsets = [0, 16], sizes = [64, 1], strides = [1, 1]} : vector<64x17xf32> to vector<64x1xf32>
    %53 = tpu.reciprocal %52 {approx = true} : vector<64x1xf32> -> vector<64x1xf32>
    %54 = vector.extract_strided_slice %51 {offsets = [0, 0], sizes = [64, 16], strides = [1, 1]} : vector<64x17xf32> to vector<64x16xf32>
    %55 = vector.broadcast %53 : vector<64x1xf32> to vector<64x16xf32>
    %56 = arith.mulf %54, %55 : vector<64x16xf32>
    %c0_18 = arith.constant 0 : index
    %c0_19 = arith.constant 0 : index
    %57 = vector.load %arg6[%c0_18, %c0_19] : memref<1x32xf32, #tpu.memory_space<vmem>>, vector<1x32xf32>
    %58 = tpu.concatenate %33, %56 in 1 : vector<64x16xf32>, vector<64x16xf32> -> vector<64x32xf32>
    %59 = vector.broadcast %57 : vector<1x32xf32> to vector<64x32xf32>
    %60 = arith.addf %58, %59 : vector<64x32xf32>
    %cst_20 = arith.constant 0.000000e+00 : f32
    %61 = vector.broadcast %cst_20 : f32 to vector<64x32xf32>
    %62 = arith.cmpf ogt, %60, %61 : vector<64x32xf32>
    %cst_21 = arith.constant 0.000000e+00 : f32
    %63 = vector.broadcast %cst_21 : f32 to vector<64x32xf32>
    %64 = arith.minimumf %60, %63 : vector<64x32xf32>
    %65 = math.exp %64 : vector<64x32xf32>
    %cst_22 = arith.constant 1.000000e+00 : f32
    %66 = vector.broadcast %cst_22 : f32 to vector<64x32xf32>
    %67 = arith.subf %65, %66 : vector<64x32xf32>
    %68 = arith.select %62, %60, %67 : vector<64x32xi1>, vector<64x32xf32>
    %69 = arith.truncf %68 : vector<64x32xf32> to vector<64x32xbf16>
    %c0_23 = arith.constant 0 : index
    %c0_24 = arith.constant 0 : index
    %70 = vector.load %arg7[%c0_23, %c0_24] : memref<32x16xbf16, #tpu.memory_space<vmem>>, vector<32x16xbf16>
    %cst_25 = arith.constant dense<0.000000e+00> : vector<64x16xf32>
    %71 = tpu.matmul %69, %70, %cst_25 {dimension_numbers = #tpu.dot_dimension_numbers<[1], [0], [0], [1], [0, 0, 1, 1], [], []>} : vector<64x32xbf16>, vector<32x16xbf16>, vector<64x16xf32> -> vector<64x16xf32>
    %72 = arith.truncf %71 : vector<64x16xf32> to vector<64x16xbf16>
    %c0_26 = arith.constant 0 : index
    %c0_27 = arith.constant 0 : index
    %73 = vector.load %arg8[%c0_26, %c0_27] : memref<8x16xbf16, #tpu.memory_space<vmem>>, vector<8x16xbf16>
    %cst_28 = arith.constant dense<0.000000e+00> : vector<8x64xf32>
    %74 = tpu.matmul %73, %72, %cst_28 {dimension_numbers = #tpu.dot_dimension_numbers<[1], [1], [0], [0], [0, 0, 1, 0], [], []>} : vector<8x16xbf16>, vector<64x16xbf16>, vector<8x64xf32> -> vector<8x64xf32>
    %c0_29 = arith.constant 0 : index
    %c0_30 = arith.constant 0 : index
    %75 = vector.load %arg9[%c0_29, %c0_30] : memref<16x8xbf16, #tpu.memory_space<vmem>>, vector<16x8xbf16>
    %cst_31 = arith.constant dense<0.000000e+00> : vector<64x8xf32>
    %76 = tpu.matmul %72, %75, %cst_31 {dimension_numbers = #tpu.dot_dimension_numbers<[1], [0], [0], [1], [0, 0, 1, 1], [], []>} : vector<64x16xbf16>, vector<16x8xbf16>, vector<64x8xf32> -> vector<64x8xf32>
    %cst_32 = arith.constant 1.000000e+00 : bf16
    %77 = vector.broadcast %cst_32 : bf16 to vector<64x1xbf16>
    %78 = vector.extract_strided_slice %76 {offsets = [0, 0], sizes = [64, 1], strides = [1, 1]} : vector<64x8xf32> to vector<64x1xf32>
    %79 = vector.extract_strided_slice %74 {offsets = [0, 0], sizes = [1, 64], strides = [1, 1]} : vector<8x64xf32> to vector<1x64xf32>
    %80 = vector.broadcast %78 : vector<64x1xf32> to vector<64x64xf32>
    %81 = vector.broadcast %79 : vector<1x64xf32> to vector<64x64xf32>
    %82 = arith.addf %80, %81 : vector<64x64xf32>
    %cst_33 = arith.constant 2.000000e-01 : f32
    %83 = vector.broadcast %cst_33 : f32 to vector<64x64xf32>
    %84 = arith.mulf %83, %82 : vector<64x64xf32>
    %85 = arith.maximumf %82, %84 : vector<64x64xf32>
    %86 = arith.addf %85, %1 : vector<64x64xf32>
    %cst_34 = arith.constant dense<0xFF800000> : vector<64xf32>
    %87 = vector.multi_reduction <maximumf>, %86, %cst_34 [1] : vector<64x64xf32> to vector<64xf32>
    %88 = vector.shape_cast %87 : vector<64xf32> to vector<64x1xf32>
    %89 = vector.broadcast %88 : vector<64x1xf32> to vector<64x64xf32>
    %90 = arith.subf %86, %89 : vector<64x64xf32>
    %91 = math.exp %90 : vector<64x64xf32>
    %92 = arith.truncf %91 : vector<64x64xf32> to vector<64x64xbf16>
    %93 = vector.extract_strided_slice %72 {offsets = [0, 0], sizes = [64, 8], strides = [1, 1]} : vector<64x16xbf16> to vector<64x8xbf16>
    %94 = tpu.concatenate %93, %77 in 1 : vector<64x8xbf16>, vector<64x1xbf16> -> vector<64x9xbf16>
    %cst_35 = arith.constant dense<0.000000e+00> : vector<64x9xf32>
    %95 = tpu.matmul %92, %94, %cst_35 {dimension_numbers = #tpu.dot_dimension_numbers<[1], [0], [0], [1], [0, 0, 1, 1], [], []>} : vector<64x64xbf16>, vector<64x9xbf16>, vector<64x9xf32> -> vector<64x9xf32>
    %96 = vector.extract_strided_slice %95 {offsets = [0, 8], sizes = [64, 1], strides = [1, 1]} : vector<64x9xf32> to vector<64x1xf32>
    %97 = tpu.reciprocal %96 {approx = true} : vector<64x1xf32> -> vector<64x1xf32>
    %98 = vector.extract_strided_slice %95 {offsets = [0, 0], sizes = [64, 8], strides = [1, 1]} : vector<64x9xf32> to vector<64x8xf32>
    %99 = vector.broadcast %97 : vector<64x1xf32> to vector<64x8xf32>
    %100 = arith.mulf %98, %99 : vector<64x8xf32>
    %101 = vector.extract_strided_slice %76 {offsets = [0, 1], sizes = [64, 1], strides = [1, 1]} : vector<64x8xf32> to vector<64x1xf32>
    %102 = vector.extract_strided_slice %74 {offsets = [1, 0], sizes = [1, 64], strides = [1, 1]} : vector<8x64xf32> to vector<1x64xf32>
    %103 = vector.broadcast %101 : vector<64x1xf32> to vector<64x64xf32>
    %104 = vector.broadcast %102 : vector<1x64xf32> to vector<64x64xf32>
    %105 = arith.addf %103, %104 : vector<64x64xf32>
    %cst_36 = arith.constant 2.000000e-01 : f32
    %106 = vector.broadcast %cst_36 : f32 to vector<64x64xf32>
    %107 = arith.mulf %106, %105 : vector<64x64xf32>
    %108 = arith.maximumf %105, %107 : vector<64x64xf32>
    %109 = arith.addf %108, %1 : vector<64x64xf32>
    %cst_37 = arith.constant dense<0xFF800000> : vector<64xf32>
    %110 = vector.multi_reduction <maximumf>, %109, %cst_37 [1] : vector<64x64xf32> to vector<64xf32>
    %111 = vector.shape_cast %110 : vector<64xf32> to vector<64x1xf32>
    %112 = vector.broadcast %111 : vector<64x1xf32> to vector<64x64xf32>
    %113 = arith.subf %109, %112 : vector<64x64xf32>
    %114 = math.exp %113 : vector<64x64xf32>
    %115 = arith.truncf %114 : vector<64x64xf32> to vector<64x64xbf16>
    %116 = vector.extract_strided_slice %72 {offsets = [0, 8], sizes = [64, 8], strides = [1, 1]} : vector<64x16xbf16> to vector<64x8xbf16>
    %117 = tpu.concatenate %116, %77 in 1 : vector<64x8xbf16>, vector<64x1xbf16> -> vector<64x9xbf16>
    %cst_38 = arith.constant dense<0.000000e+00> : vector<64x9xf32>
    %118 = tpu.matmul %115, %117, %cst_38 {dimension_numbers = #tpu.dot_dimension_numbers<[1], [0], [0], [1], [0, 0, 1, 1], [], []>} : vector<64x64xbf16>, vector<64x9xbf16>, vector<64x9xf32> -> vector<64x9xf32>
    %119 = vector.extract_strided_slice %118 {offsets = [0, 8], sizes = [64, 1], strides = [1, 1]} : vector<64x9xf32> to vector<64x1xf32>
    %120 = tpu.reciprocal %119 {approx = true} : vector<64x1xf32> -> vector<64x1xf32>
    %121 = vector.extract_strided_slice %118 {offsets = [0, 0], sizes = [64, 8], strides = [1, 1]} : vector<64x9xf32> to vector<64x8xf32>
    %122 = vector.broadcast %120 : vector<64x1xf32> to vector<64x8xf32>
    %123 = arith.mulf %121, %122 : vector<64x8xf32>
    %c0_39 = arith.constant 0 : index
    %c0_40 = arith.constant 0 : index
    %124 = vector.load %arg10[%c0_39, %c0_40] : memref<1x8xf32, #tpu.memory_space<vmem>>, vector<1x8xf32>
    %125 = arith.addf %100, %123 : vector<64x8xf32>
    %cst_41 = arith.constant 5.000000e-01 : f32
    %126 = vector.broadcast %cst_41 : f32 to vector<64x8xf32>
    %127 = arith.mulf %125, %126 : vector<64x8xf32>
    %128 = vector.broadcast %124 : vector<1x8xf32> to vector<64x8xf32>
    %129 = arith.addf %127, %128 : vector<64x8xf32>
    %cst_42 = arith.constant 0.000000e+00 : f32
    %130 = vector.broadcast %cst_42 : f32 to vector<64x120xf32>
    %131 = tpu.concatenate %129, %130 in 1 : vector<64x8xf32>, vector<64x120xf32> -> vector<64x128xf32>
    %c0_43 = arith.constant 0 : index
    %c0_44 = arith.constant 0 : index
    %132 = vector.load %arg11[%c0_43, %c0_44] : memref<64x128xf32, #tpu.memory_space<vmem>>, vector<64x128xf32>
    tpu.vector_store %arg11[%c0_43, %c0_44], %131 {strides = array<i32>} : memref<64x128xf32, #tpu.memory_space<vmem>>, vector<64x128xf32>,
    return
  }
  func.func @transform_0(%arg0: i32) -> (i32, i32) {
    %c0_i32 = arith.constant 0 : i32
    %c0_i32_0 = arith.constant 0 : i32
    %c0_i32_1 = arith.constant 0 : i32
    return %c0_i32, %c0_i32_0 : i32, i32
  }
  func.func @transform_1(%arg0: i32) -> (i32, i32) {
    %c0_i32 = arith.constant 0 : i32
    %c0_i32_0 = arith.constant 0 : i32
    %c0_i32_1 = arith.constant 0 : i32
    return %c0_i32, %c0_i32_0 : i32, i32
  }
  func.func @transform_2(%arg0: i32) -> (i32, i32) {
    %c0_i32 = arith.constant 0 : i32
    %c0_i32_0 = arith.constant 0 : i32
    %c0_i32_1 = arith.constant 0 : i32
    return %c0_i32, %c0_i32_0 : i32, i32
  }
  func.func @transform_3(%arg0: i32) -> (i32, i32) {
    %c0_i32 = arith.constant 0 : i32
    %c0_i32_0 = arith.constant 0 : i32
    %c0_i32_1 = arith.constant 0 : i32
    return %c0_i32, %c0_i32_0 : i32, i32
  }
  func.func @transform_4(%arg0: i32) -> (i32, i32) {
    %c0_i32 = arith.constant 0 : i32
    %c0_i32_0 = arith.constant 0 : i32
    %c0_i32_1 = arith.constant 0 : i32
    return %c0_i32, %c0_i32_0 : i32, i32
  }
  func.func @transform_5(%arg0: i32) -> (i32, i32) {
    %c0_i32 = arith.constant 0 : i32
    %c0_i32_0 = arith.constant 0 : i32
    %c0_i32_1 = arith.constant 0 : i32
    return %c0_i32, %c0_i32_0 : i32, i32
  }
  func.func @transform_6(%arg0: i32) -> (i32, i32) {
    %c0_i32 = arith.constant 0 : i32
    %c0_i32_0 = arith.constant 0 : i32
    %c0_i32_1 = arith.constant 0 : i32
    return %c0_i32, %c0_i32_0 : i32, i32
  }
  func.func @transform_7(%arg0: i32) -> (i32, i32) {
    %c0_i32 = arith.constant 0 : i32
    %c0_i32_0 = arith.constant 0 : i32
    %c0_i32_1 = arith.constant 0 : i32
    return %c0_i32, %c0_i32_0 : i32, i32
  }
  func.func @transform_8(%arg0: i32) -> (i32, i32) {
    %c0_i32 = arith.constant 0 : i32
    %c0_i32_0 = arith.constant 0 : i32
    %c0_i32_1 = arith.constant 0 : i32
    return %c0_i32, %c0_i32_0 : i32, i32
  }
  func.func @transform_9(%arg0: i32) -> (i32, i32) {
    %c0_i32 = arith.constant 0 : i32
    %c0_i32_0 = arith.constant 0 : i32
    %c0_i32_1 = arith.constant 0 : i32
    return %c0_i32, %c0_i32_0 : i32, i32
  }
  func.func @transform_10(%arg0: i32) -> (i32, i32) {
    %c0_i32 = arith.constant 0 : i32
    %c0_i32_0 = arith.constant 0 : i32
    %c0_i32_1 = arith.constant 0 : i32
    return %c0_i32, %c0_i32_0 : i32, i32
  }
}

</mosaic_0001>

<llo_original>
// kernel: tpu_custom_call.1
$region0: #{tpu_custom_call.1}
  #allocation0 [shape = 'u32[]', space=smem, size = 0x4, offset = 0x4, fixed_abs, tag = 'smem constant byte address 0x4 - core index']
  #allocation1 [shape = 'u32[144,128]{1,0:T(1,128)}', space=vmem, size = 0x12000, scoped, tag = 'internal scratch']
  %s0 = inlined_call_operand.vmem [shape: bf16[64,8], index: 0, kind: input, shape index: {}]
  %s1 = inlined_call_operand.vmem [shape: bf16[64,64], index: 1, kind: input, shape index: {}]
  %s2 = inlined_call_operand.vmem [shape: bf16[8,32], index: 2, kind: input, shape index: {}]
  %s3 = inlined_call_operand.vmem [shape: bf16[8,32], index: 3, kind: input, shape index: {}]
  %s4 = inlined_call_operand.vmem [shape: bf16[32,8], index: 4, kind: input, shape index: {}]
  %s5 = inlined_call_operand.vmem [shape: f32[1,32], index: 5, kind: input, shape index: {}]
  %s6 = inlined_call_operand.vmem [shape: bf16[32,16], index: 6, kind: input, shape index: {}]
  %s7 = inlined_call_operand.vmem [shape: bf16[8,16], index: 7, kind: input, shape index: {}]
  %s8 = inlined_call_operand.vmem [shape: bf16[16,8], index: 8, kind: input, shape index: {}]
  %s9 = inlined_call_operand.vmem [shape: f32[1,8], index: 9, kind: input, shape index: {}]
  %s10 = inlined_call_operand.hbm [shape: f32[64,128], index: 10, kind: output, shape index: {}]
  %s11 = sld [smem:[#allocation0]]
  $region50: #{tpu_custom_call.1} parent=0
    _
  %s13 = ssub.s32 1, %s11
  %s14 = scalar_select 0, %s13, %s11
  $region1: #{tpu_custom_call.1} parent=0
    #allocation2 [shape = 'u8[32768]{0}', space=vmem, size = 0x8000, scoped, tag = 'output window, operand 0, single buffered']
    #allocation3 [shape = 's32[1]{0}', space=sflag, size = 0x4, scoped, tag = 'scoped memory for tpu_custom_call.1']
    %15 = vsyncpa [#allocation3], 0
    // Predicated region
    $region2: #{tpu_custom_call.1} parent=1 // pred_check
      _
    $region3: #{tpu_custom_call.1} parent=1 // pred_check_branch
      %17 = sbr.rel (0) target = $region5
    $region4: #{tpu_custom_call.1} parent=1 // pred_region
      _
    $region5: #{tpu_custom_call.1} parent=1 // pred_fallthru
      _
    // Predicated region
    $region6: #{tpu_custom_call.1} parent=1 // pred_check
      _
    $region7: #{tpu_custom_call.1} parent=1 // pred_check_branch
      %19 = sbr.rel (0) target = $region9
    $region8: #{tpu_custom_call.1} parent=1 // pred_region
      _
    $region9: #{tpu_custom_call.1} parent=1 // pred_fallthru
      _
    // Predicated region
    $region10: #{tpu_custom_call.1} parent=1 // pred_check
      _
    $region11: #{tpu_custom_call.1} parent=1 // pred_check_branch
      %21 = sbr.rel (0) target = $region13
    $region12: #{tpu_custom_call.1} parent=1 // pred_region
      _
    $region13: #{tpu_custom_call.1} parent=1 // pred_fallthru
      _
    // Predicated region
    $region14: #{tpu_custom_call.1} parent=1 // pred_check
      _
    $region15: #{tpu_custom_call.1} parent=1 // pred_check_branch
      %23 = sbr.rel (0) target = $region17
    $region16: #{tpu_custom_call.1} parent=1 // pred_region
      _
    $region17: #{tpu_custom_call.1} parent=1 // pred_fallthru
      _
    // Predicated region
    $region18: #{tpu_custom_call.1} parent=1 // pred_check
      _
    $region19: #{tpu_custom_call.1} parent=1 // pred_check_branch
      %25 = sbr.rel (0) target = $region21
    $region20: #{tpu_custom_call.1} parent=1 // pred_region
      _
    $region21: #{tpu_custom_call.1} parent=1 // pred_fallthru
      _
    // Predicated region
    $region22: #{tpu_custom_call.1} parent=1 // pred_check
      _
    $region23: #{tpu_custom_call.1} parent=1 // pred_check_branch
      %27 = sbr.rel (0) target = $region25
    $region24: #{tpu_custom_call.1} parent=1 // pred_region
      _
    $region25: #{tpu_custom_call.1} parent=1 // pred_fallthru
      _
    // Predicated region
    $region26: #{tpu_custom_call.1} parent=1 // pred_check
      _
    $region27: #{tpu_custom_call.1} parent=1 // pred_check_branch
      %29 = sbr.rel (0) target = $region29
    $region28: #{tpu_custom_call.1} parent=1 // pred_region
      _
    $region29: #{tpu_custom_call.1} parent=1 // pred_fallthru
      _
    // Predicated region
    $region30: #{tpu_custom_call.1} parent=1 // pred_check
      _
    $region31: #{tpu_custom_call.1} parent=1 // pred_check_branch
      %31 = sbr.rel (0) target = $region33
    $region32: #{tpu_custom_call.1} parent=1 // pred_region
      _
    $region33: #{tpu_custom_call.1} parent=1 // pred_fallthru
      _
    // Predicated region
    $region34: #{tpu_custom_call.1} parent=1 // pred_check
      _
    $region35: #{tpu_custom_call.1} parent=1 // pred_check_branch
      %33 = sbr.rel (0) target = $region37
    $region36: #{tpu_custom_call.1} parent=1 // pred_region
      _
    $region37: #{tpu_custom_call.1} parent=1 // pred_fallthru
      _
    // Predicated region
    $region38: #{tpu_custom_call.1} parent=1 // pred_check
      _
    $region39: #{tpu_custom_call.1} parent=1 // pred_check_branch
      %35 = sbr.rel (0) target = $region41
    $region40: #{tpu_custom_call.1} parent=1 // pred_region
      _
    $region41: #{tpu_custom_call.1} parent=1 // pred_fallthru
      _
    %v38 = vld [vmem:[%s1] sm:$0xf]
    %v39 = vld [vmem:[%s1 + $0x4] sm:$0xf]
    %v40 = vld [vmem:[%s1 + $0x8] sm:$0xf]
    %v41 = vld [vmem:[%s1 + $0xc] sm:$0xf]
    %v42 = vld [vmem:[%s1 + $0x10] sm:$0xf]
    %v43 = vld [vmem:[%s1 + $0x14] sm:$0xf]
    %v44 = vld [vmem:[%s1 + $0x18] sm:$0xf]
    %v45 = vld [vmem:[%s1 + $0x1c] sm:$0xf]
    %v46 = vunpack.c.l.bf16 %v38
    %v47 = vunpack.c.l.bf16 %v39
    %v48 = vunpack.c.l.bf16 %v40
    %v49 = vunpack.c.l.bf16 %v41
    %v50 = vunpack.c.l.bf16 %v42
    %v51 = vunpack.c.l.bf16 %v43
    %v52 = vunpack.c.l.bf16 %v44
    %v53 = vunpack.c.l.bf16 %v45
    %v54 = vld [vmem:[%s0] sm:$0xf]
    %v55 = vld [vmem:[%s0 + $0x4] sm:$0xf]
    %v56 = vld [vmem:[%s0 + $0x8] sm:$0xf]
    %v57 = vld [vmem:[%s0 + $0xc] sm:$0xf]
    %v58 = vld [vmem:[%s0 + $0x10] sm:$0xf]
    %v59 = vld [vmem:[%s0 + $0x14] sm:$0xf]
    %v60 = vld [vmem:[%s0 + $0x18] sm:$0xf]
    %v61 = vld [vmem:[%s0 + $0x1c] sm:$0xf]
    %v62 = vld [vmem:[%s2] sm:$0xf]
    %v71 = vunpack.c.l.b16 %v54
    %v72 = vunpack.c.l.b16 %v55
    %v73 = vunpack.c.l.b16 %v56
    %v74 = vunpack.c.l.b16 %v57
    %v75 = vunpack.c.l.b16 %v58
    %v76 = vunpack.c.l.b16 %v59
    %v77 = vunpack.c.l.b16 %v60
    %v78 = vunpack.c.l.b16 %v61
    %v79 = vpack.c.b16 %v72, %v71
    %v80 = vpack.c.b16 %v74, %v73
    %v81 = vpack.c.b16 %v76, %v75
    %v82 = vpack.c.b16 %v78, %v77
    %vm83 = vcmask 64512
    %v85 = vsel %vm83, %v79, 0
    %v88 = vsel %vm83, %v80, 0
    %v91 = vsel %vm83, %v81, 0
    %v94 = vsel %vm83, %v82, 0
    %vm96 = vcmask 1043456
    %v98 = vsel %vm96, %v62, 0
    %100 = vmatprep.subr.bf16.mxu0 0
    %101 = vmatpush1.bf16.msra.mxu0 %v98
    %102 = vmatprep.subr.bf16.mxu0 0
    %103 = vmatpush1.bf16.msra.mxu0 0
    %104 = vmatprep.subr.bf16.mxu0 0
    %105 = vmatpush1.bf16.msra.mxu0 0
    %106 = vmatprep.subr.bf16.mxu0 0
    %107 = vmatpush1.bf16.msra.mxu0 0
    %108 = vmatprep.subr.bf16.mxu0 0
    %109 = vmatpush1.bf16.msra.mxu0 0
    %110 = vmatprep.subr.bf16.mxu0 0
    %111 = vmatpush1.bf16.msra.mxu0 0
    %112 = vmatprep.subr.bf16.mxu0 0
    %113 = vmatpush1.bf16.msra.mxu0 0
    %114 = vmatprep.subr.bf16.mxu0 0
    %115 = vmatpush1.bf16.msra.mxu0 0
    %116 = vmatprep.subr.bf16.mxu0 0
    %117 = vmatpush1.bf16.msra.mxu0 0
    %118 = vmatprep.subr.bf16.mxu0 0
    %119 = vmatpush1.bf16.msra.mxu0 0
    %120 = vmatprep.subr.bf16.mxu0 0
    %121 = vmatpush1.bf16.msra.mxu0 0
    %122 = vmatprep.subr.bf16.mxu0 0
    %123 = vmatpush1.bf16.msra.mxu0 0
    %124 = vmatprep.subr.bf16.mxu0 0
    %125 = vmatpush1.bf16.msra.mxu0 0
    %126 = vmatprep.subr.bf16.mxu0 0
    %127 = vmatpush1.bf16.msra.mxu0 0
    %128 = vmatprep.subr.bf16.mxu0 0
    %129 = vmatpush1.bf16.msra.mxu0 0
    %130 = vmatprep.subr.bf16.mxu0 0
    %131 = vmatpush1.bf16.msra.mxu0 0
    %132 = vmatprep.mubr.bf16.mxu0 0
    %133 = vmatmul.mubr.bf16.gmra.mrb[0].mxu0 %v85
    %v134 = vpop.f32.mrb[0].mxu0
    %v135 = vadd.f32 0.0, %v134
    %v136 = vpop.f32.mrb[0].mxu0
    %v137 = vpop.f32.mrb[0].mxu0
    %v138 = vadd.f32 0.0, %v137
    %v139 = vpop.f32.mrb[0].mxu0
    %140 = vmatprep.mubr.bf16.mxu0 0
    %141 = vmatmul.mubr.bf16.gmra.mrb[0].mxu0 %v88
    %v142 = vpop.f32.mrb[0].mxu0
    %v143 = vadd.f32 0.0, %v142
    %v144 = vpop.f32.mrb[0].mxu0
    %v145 = vpop.f32.mrb[0].mxu0
    %v146 = vadd.f32 0.0, %v145
    %v147 = vpop.f32.mrb[0].mxu0
    %148 = vmatprep.mubr.bf16.mxu0 0
    %149 = vmatmul.mubr.bf16.gmra.mrb[0].mxu0 %v91
    %v150 = vpop.f32.mrb[0].mxu0
    %v151 = vadd.f32 0.0, %v150
    %v152 = vpop.f32.mrb[0].mxu0
    %v153 = vpop.f32.mrb[0].mxu0
    %v154 = vadd.f32 0.0, %v153
    %v155 = vpop.f32.mrb[0].mxu0
    %156 = vmatprep.mubr.bf16.mxu0 0
    %157 = vmatmul.mubr.bf16.gmra.mrb[0].mxu0 %v94
    %v158 = vpop.f32.mrb[0].mxu0
    %v159 = vadd.f32 0.0, %v158
    %v160 = vpop.f32.mrb[0].mxu0
    %v161 = vpop.f32.mrb[0].mxu0
    %v162 = vadd.f32 0.0, %v161
    %v163 = vpop.f32.mrb[0].mxu0
    %164 = vdwg.mxu0
    %v165 = vpack.c.bf16 %v138, %v135
    %v166 = vpack.c.bf16 %v146, %v143
    %v167 = vpack.c.bf16 %v154, %v151
    %v168 = vpack.c.bf16 %v162, %v159
    %v169 = vld [vmem:[%s3] sm:$0xf]
    %vm170 = vcmask 261120
    %v172 = vsel %vm170, %v169, 0
    %v175 = vsel %vm170, %v165, 0
    %v178 = vsel %vm170, %v166, 0
    %v181 = vsel %vm170, %v167, 0
    %v184 = vsel %vm170, %v168, 0
    %186 = vmatprep.subr.bf16.mxu0 0
    %187 = vmatpush1.bf16.xpose.msra.mxu0 %v175
    %188 = vmatprep.subr.bf16.mxu0 0
    %189 = vmatpush1.bf16.xpose.msra.mxu0 %v178
    %190 = vmatprep.subr.bf16.mxu0 0
    %191 = vmatpush1.bf16.xpose.msra.mxu0 %v181
    %192 = vmatprep.subr.bf16.mxu0 0
    %193 = vmatpush1.bf16.xpose.msra.mxu0 %v184
    %194 = vmatprep.subr.bf16.mxu0 0
    %195 = vmatpush1.bf16.xpose.msra.mxu0 0
    %196 = vmatprep.subr.bf16.mxu0 0
    %197 = vmatpush1.bf16.xpose.msra.mxu0 0
    %198 = vmatprep.subr.bf16.mxu0 0
    %199 = vmatpush1.bf16.xpose.msra.mxu0 0
    %200 = vmatprep.subr.bf16.mxu0 0
    %201 = vmatpush1.bf16.xpose.msra.mxu0 0
    %202 = vmatprep.subr.bf16.mxu0 0
    %203 = vmatpush1.bf16.xpose.msra.mxu0 0
    %204 = vmatprep.subr.bf16.mxu0 0
    %205 = vmatpush1.bf16.xpose.msra.mxu0 0
    %206 = vmatprep.subr.bf16.mxu0 0
    %207 = vmatpush1.bf16.xpose.msra.mxu0 0
    %208 = vmatprep.subr.bf16.mxu0 0
    %209 = vmatpush1.bf16.xpose.msra.mxu0 0
    %210 = vmatprep.subr.bf16.mxu0 0
    %211 = vmatpush1.bf16.xpose.msra.mxu0 0
    %212 = vmatprep.subr.bf16.mxu0 0
    %213 = vmatpush1.bf16.xpose.msra.mxu0 0
    %214 = vmatprep.subr.bf16.mxu0 0
    %215 = vmatpush1.bf16.xpose.msra.mxu0 0
    %216 = vmatprep.subr.bf16.mxu0 0
    %217 = vmatpush1.bf16.xpose.msra.mxu0 0
    %218 = vmatprep.mubr.bf16.mxu0 0
    %219 = vmatmul.mubr.bf16.gmra.mrb[0].mxu0 %v172
    %v220 = vpop.f32.mrb[0].mxu0
    %v221 = vadd.f32 0.0, %v220
    %v222 = vpop.f32.mrb[0].mxu0
    %v223 = vpop.f32.mrb[0].mxu0
    %v224 = vpop.f32.mrb[0].mxu0
    %225 = vdwg.mxu0
    %v226 = vld [vmem:[%s4] sm:$0xf]
    %v227 = vld [vmem:[%s4 + $0x4] sm:$0xf]
    %v228 = vld [vmem:[%s4 + $0x8] sm:$0xf]
    %v229 = vld [vmem:[%s4 + $0xc] sm:$0xf]
    %v234 = vunpack.c.l.b16 %v226
    %v235 = vunpack.c.l.b16 %v227
    %v236 = vunpack.c.l.b16 %v228
    %v237 = vunpack.c.l.b16 %v229
    %v238 = vpack.c.b16 %v235, %v234
    %v239 = vpack.c.b16 %v237, %v236
    %242 = vmatprep.subr.bf16.mxu0 0
    %243 = vmatpush1.bf16.msra.mxu0 %v238
    %244 = vmatprep.subr.bf16.mxu0 0
    %245 = vmatpush1.bf16.msra.mxu0 %v239
    %246 = vmatprep.subr.bf16.mxu0 0
    %247 = vmatpush1.bf16.msra.mxu0 0
    %248 = vmatprep.subr.bf16.mxu0 0
    %249 = vmatpush1.bf16.msra.mxu0 0
    %250 = vmatprep.subr.bf16.mxu0 0
    %251 = vmatpush1.bf16.msra.mxu0 0
    %252 = vmatprep.subr.bf16.mxu0 0
    %253 = vmatpush1.bf16.msra.mxu0 0
    %254 = vmatprep.subr.bf16.mxu0 0
    %255 = vmatpush1.bf16.msra.mxu0 0
    %256 = vmatprep.subr.bf16.mxu0 0
    %257 = vmatpush1.bf16.msra.mxu0 0
    %258 = vmatprep.subr.bf16.mxu0 0
    %259 = vmatpush1.bf16.msra.mxu0 0
    %260 = vmatprep.subr.bf16.mxu0 0
    %261 = vmatpush1.bf16.msra.mxu0 0
    %262 = vmatprep.subr.bf16.mxu0 0
    %263 = vmatpush1.bf16.msra.mxu0 0
    %264 = vmatprep.subr.bf16.mxu0 0
    %265 = vmatpush1.bf16.msra.mxu0 0
    %266 = vmatprep.subr.bf16.mxu0 0
    %267 = vmatpush1.bf16.msra.mxu0 0
    %268 = vmatprep.subr.bf16.mxu0 0
    %269 = vmatpush1.bf16.msra.mxu0 0
    %270 = vmatprep.subr.bf16.mxu0 0
    %271 = vmatpush1.bf16.msra.mxu0 0
    %272 = vmatprep.subr.bf16.mxu0 0
    %273 = vmatpush1.bf16.msra.mxu0 0
    %274 = vmatprep.mubr.bf16.mxu0 0
    %275 = vmatmul.mubr.bf16.gmra.mrb[0].mxu0 %v175
    %v276 = vpop.f32.mrb[0].mxu0
    %v277 = vadd.f32 0.0, %v276
    %v278 = vpop.f32.mrb[0].mxu0
    %v279 = vpop.f32.mrb[0].mxu0
    %v280 = vadd.f32 0.0, %v279
    %v281 = vpop.f32.mrb[0].mxu0
    %282 = vmatprep.mubr.bf16.mxu0 0
    %283 = vmatmul.mubr.bf16.gmra.mrb[0].mxu0 %v178
    %v284 = vpop.f32.mrb[0].mxu0
    %v285 = vadd.f32 0.0, %v284
    %v286 = vpop.f32.mrb[0].mxu0
    %v287 = vpop.f32.mrb[0].mxu0
    %v288 = vadd.f32 0.0, %v287
    %v289 = vpop.f32.mrb[0].mxu0
    %290 = vmatprep.mubr.bf16.mxu0 0
    %291 = vmatmul.mubr.bf16.gmra.mrb[0].mxu0 %v181
    %v292 = vpop.f32.mrb[0].mxu0
    %v293 = vadd.f32 0.0, %v292
    %v294 = vpop.f32.mrb[0].mxu0
    %v295 = vpop.f32.mrb[0].mxu0
    %v296 = vadd.f32 0.0, %v295
    %v297 = vpop.f32.mrb[0].mxu0
    %298 = vmatprep.mubr.bf16.mxu0 0
    %299 = vmatmul.mubr.bf16.gmra.mrb[0].mxu0 %v184
    %v300 = vpop.f32.mrb[0].mxu0
    %v301 = vadd.f32 0.0, %v300
    %v302 = vpop.f32.mrb[0].mxu0
    %v303 = vpop.f32.mrb[0].mxu0
    %v304 = vadd.f32 0.0, %v303
    %v305 = vpop.f32.mrb[0].mxu0
    %306 = vdwg.mxu0
    %308 = vset.pattern.permute.xlu0 0
    %309 = vperm.xlu0 %308, %v277
    %v310 = vpop.permute.xlu0 %309
    %313 = vset.pattern.permute.xlu0 0
    %314 = vperm.xlu0 %313, %v280
    %v315 = vpop.permute.xlu0 %314
    %318 = vset.pattern.permute.xlu0 0
    %319 = vperm.xlu0 %318, %v285
    %v320 = vpop.permute.xlu0 %319
    %323 = vset.pattern.permute.xlu0 0
    %324 = vperm.xlu0 %323, %v288
    %v325 = vpop.permute.xlu0 %324
    %328 = vset.pattern.permute.xlu0 0
    %329 = vperm.xlu0 %328, %v293
    %v330 = vpop.permute.xlu0 %329
    %333 = vset.pattern.permute.xlu0 0
    %334 = vperm.xlu0 %333, %v296
    %v335 = vpop.permute.xlu0 %334
    %338 = vset.pattern.permute.xlu0 0
    %339 = vperm.xlu0 %338, %v301
    %v340 = vpop.permute.xlu0 %339
    %343 = vset.pattern.permute.xlu0 0
    %344 = vperm.xlu0 %343, %v304
    %v345 = vpop.permute.xlu0 %344
    %v347 = vlaneseq
    %v348 = vshrl.u32 %v347, 7
    %v349 = vsub.s32 0, %v348
    %v350 = vrot.slane %v221, %v349
    %v351 = vadd.f32 %v310, %v350
    %v352 = vadd.f32 %v315, %v350
    %v353 = vadd.f32 %v320, %v350
    %v354 = vadd.f32 %v325, %v350
    %v355 = vadd.f32 %v330, %v350
    %v356 = vadd.f32 %v335, %v350
    %v357 = vadd.f32 %v340, %v350
    %v358 = vadd.f32 %v345, %v350
    %v359 = vmul.f32 %v351, 0.2
    %v360 = vmul.f32 %v352, 0.2
    %v361 = vmul.f32 %v353, 0.2
    %v362 = vmul.f32 %v354, 0.2
    %v363 = vmul.f32 %v355, 0.2
    %v364 = vmul.f32 %v356, 0.2
    %v365 = vmul.f32 %v357, 0.2
    %v366 = vmul.f32 %v358, 0.2
    %v367 = vmax.f32 %v351, %v359
    %v368 = vmax.f32 %v352, %v360
    %v369 = vmax.f32 %v353, %v361
    %v370 = vmax.f32 %v354, %v362
    %v371 = vmax.f32 %v355, %v363
    %v372 = vmax.f32 %v356, %v364
    %v373 = vmax.f32 %v357, %v365
    %v374 = vmax.f32 %v358, %v366
    %v375 = vadd.f32 %v367, %v46
    %v376 = vadd.f32 %v368, %v47
    %v377 = vadd.f32 %v369, %v48
    %v378 = vadd.f32 %v370, %v49
    %v379 = vadd.f32 %v371, %v50
    %v380 = vadd.f32 %v372, %v51
    %v381 = vadd.f32 %v373, %v52
    %v382 = vadd.f32 %v374, %v53
    %vm383 = vcmask 523264
    %v384 = vsel %vm383, %v375, -inf
    %385 = vmax.xlane.f32.xlu0 %v384
    %v386 = vpop.xlane.xlu0 %385
    %v387 = vsel %vm383, %v376, -inf
    %388 = vmax.xlane.f32.xlu0 %v387
    %v389 = vpop.xlane.xlu0 %388
    %v390 = vsel %vm383, %v377, -inf
    %391 = vmax.xlane.f32.xlu0 %v390
    %v392 = vpop.xlane.xlu0 %391
    %v393 = vsel %vm383, %v378, -inf
    %394 = vmax.xlane.f32.xlu0 %v393
    %v395 = vpop.xlane.xlu0 %394
    %v396 = vsel %vm383, %v379, -inf
    %397 = vmax.xlane.f32.xlu0 %v396
    %v398 = vpop.xlane.xlu0 %397
    %v399 = vsel %vm383, %v380, -inf
    %400 = vmax.xlane.f32.xlu0 %v399
    %v401 = vpop.xlane.xlu0 %400
    %v402 = vsel %vm383, %v381, -inf
    %403 = vmax.xlane.f32.xlu0 %v402
    %v404 = vpop.xlane.xlu0 %403
    %v405 = vsel %vm383, %v382, -inf
    %406 = vmax.xlane.f32.xlu0 %v405
    %v407 = vpop.xlane.xlu0 %406
    %v408 = vsub.f32 %v375, %v386
    %v409 = vsub.f32 %v376, %v389
    %v410 = vsub.f32 %v377, %v392
    %v411 = vsub.f32 %v378, %v395
    %v412 = vsub.f32 %v379, %v398
    %v413 = vsub.f32 %v380, %v401
    %v414 = vsub.f32 %v381, %v404
    %v415 = vsub.f32 %v382, %v407
    %v416 = vmul.f32 %v408, 1.442695
    %v417 = vpow.pop %v416
    %v418 = vmul.f32 %v409, 1.442695
    %v419 = vpow.pop %v418
    %v420 = vmul.f32 %v410, 1.442695
    %v421 = vpow.pop %v420
    %v422 = vmul.f32 %v411, 1.442695
    %v423 = vpow.pop %v422
    %v424 = vmul.f32 %v412, 1.442695
    %v425 = vpow.pop %v424
    %v426 = vmul.f32 %v413, 1.442695
    %v427 = vpow.pop %v426
    %v428 = vmul.f32 %v414, 1.442695
    %v429 = vpow.pop %v428
    %v430 = vmul.f32 %v415, 1.442695
    %v431 = vpow.pop %v430
    %v432 = vpack.c.bf16 %v419, %v417
    %v433 = vpack.c.bf16 %v423, %v421
    %v434 = vpack.c.bf16 %v427, %v425
    %v435 = vpack.c.bf16 %v431, %v429
    %vm436 = vcmask 130048
    %v438 = vsel %vm436, %v165, 1065369472
    %v440 = vsel %vm436, %v166, 1065369472
    %v442 = vsel %vm436, %v167, 1065369472
    %v444 = vsel %vm436, %v168, 1065369472
    %v447 = vsel %vm383, %v432, 0
    %v450 = vsel %vm383, %v433, 0
    %v453 = vsel %vm383, %v434, 0
    %v456 = vsel %vm383, %v435, 0
    %458 = vmatprep.subr.bf16.mxu0 0
    %459 = vmatpush1.bf16.msra.mxu0 %v438
    %460 = vmatprep.subr.bf16.mxu0 0
    %461 = vmatpush1.bf16.msra.mxu0 %v440
    %462 = vmatprep.subr.bf16.mxu0 0
    %463 = vmatpush1.bf16.msra.mxu0 %v442
    %464 = vmatprep.subr.bf16.mxu0 0
    %465 = vmatpush1.bf16.msra.mxu0 %v444
    %466 = vmatprep.subr.bf16.mxu0 0
    %467 = vmatpush1.bf16.msra.mxu0 0
    %468 = vmatprep.subr.bf16.mxu0 0
    %469 = vmatpush1.bf16.msra.mxu0 0
    %470 = vmatprep.subr.bf16.mxu0 0
    %471 = vmatpush1.bf16.msra.mxu0 0
    %472 = vmatprep.subr.bf16.mxu0 0
    %473 = vmatpush1.bf16.msra.mxu0 0
    %474 = vmatprep.subr.bf16.mxu0 0
    %475 = vmatpush1.bf16.msra.mxu0 0
    %476 = vmatprep.subr.bf16.mxu0 0
    %477 = vmatpush1.bf16.msra.mxu0 0
    %478 = vmatprep.subr.bf16.mxu0 0
    %479 = vmatpush1.bf16.msra.mxu0 0
    %480 = vmatprep.subr.bf16.mxu0 0
    %481 = vmatpush1.bf16.msra.mxu0 0
    %482 = vmatprep.subr.bf16.mxu0 0
    %483 = vmatpush1.bf16.msra.mxu0 0
    %484 = vmatprep.subr.bf16.mxu0 0
    %485 = vmatpush1.bf16.msra.mxu0 0
    %486 = vmatprep.subr.bf16.mxu0 0
    %487 = vmatpush1.bf16.msra.mxu0 0
    %488 = vmatprep.subr.bf16.mxu0 0
    %489 = vmatpush1.bf16.msra.mxu0 0
    %490 = vmatprep.mubr.bf16.mxu0 0
    %491 = vmatmul.mubr.bf16.gmra.mrb[0].mxu0 %v447
    %v492 = vpop.f32.mrb[0].mxu0
    %v493 = vadd.f32 0.0, %v492
    %v494 = vpop.f32.mrb[0].mxu0
    %v495 = vpop.f32.mrb[0].mxu0
    %v496 = vadd.f32 0.0, %v495
    %v497 = vpop.f32.mrb[0].mxu0
    %498 = vmatprep.mubr.bf16.mxu0 0
    %499 = vmatmul.mubr.bf16.gmra.mrb[0].mxu0 %v450
    %v500 = vpop.f32.mrb[0].mxu0
    %v501 = vadd.f32 0.0, %v500
    %v502 = vpop.f32.mrb[0].mxu0
    %v503 = vpop.f32.mrb[0].mxu0
    %v504 = vadd.f32 0.0, %v503
    %v505 = vpop.f32.mrb[0].mxu0
    %506 = vmatprep.mubr.bf16.mxu0 0
    %507 = vmatmul.mubr.bf16.gmra.mrb[0].mxu0 %v453
    %v508 = vpop.f32.mrb[0].mxu0
    %v509 = vadd.f32 0.0, %v508
    %v510 = vpop.f32.mrb[0].mxu0
    %v511 = vpop.f32.mrb[0].mxu0
    %v512 = vadd.f32 0.0, %v511
    %v513 = vpop.f32.mrb[0].mxu0
    %514 = vmatprep.mubr.bf16.mxu0 0
    %515 = vmatmul.mubr.bf16.gmra.mrb[0].mxu0 %v456
    %v516 = vpop.f32.mrb[0].mxu0
    %v517 = vadd.f32 0.0, %v516
    %v518 = vpop.f32.mrb[0].mxu0
    %v519 = vpop.f32.mrb[0].mxu0
    %v520 = vadd.f32 0.0, %v519
    %v521 = vpop.f32.mrb[0].mxu0
    %522 = vdwg.mxu0
    %v523 = vrcp.pop %v493
    %v524 = vrcp.pop %v496
    %v525 = vrcp.pop %v501
    %v526 = vrcp.pop %v504
    %v527 = vrcp.pop %v509
    %v528 = vrcp.pop %v512
    %v529 = vrcp.pop %v517
    %v530 = vrcp.pop %v520
    %532 = vset.pattern.permute.xlu0 16
    %533 = vperm.xlu0 %532, %v523
    %v534 = vpop.permute.xlu0 %533
    %537 = vset.pattern.permute.xlu0 16
    %538 = vperm.xlu0 %537, %v524
    %v539 = vpop.permute.xlu0 %538
    %542 = vset.pattern.permute.xlu0 16
    %543 = vperm.xlu0 %542, %v525
    %v544 = vpop.permute.xlu0 %543
    %547 = vset.pattern.permute.xlu0 16
    %548 = vperm.xlu0 %547, %v526
    %v549 = vpop.permute.xlu0 %548
    %552 = vset.pattern.permute.xlu0 16
    %553 = vperm.xlu0 %552, %v527
    %v554 = vpop.permute.xlu0 %553
    %557 = vset.pattern.permute.xlu0 16
    %558 = vperm.xlu0 %557, %v528
    %v559 = vpop.permute.xlu0 %558
    %562 = vset.pattern.permute.xlu0 16
    %563 = vperm.xlu0 %562, %v529
    %v564 = vpop.permute.xlu0 %563
    %567 = vset.pattern.permute.xlu0 16
    %568 = vperm.xlu0 %567, %v530
    %v569 = vpop.permute.xlu0 %568
    %v571 = vmul.f32 %v493, %v534
    %v572 = vmul.f32 %v496, %v539
    %v573 = vmul.f32 %v501, %v544
    %v574 = vmul.f32 %v504, %v549
    %v575 = vmul.f32 %v509, %v554
    %v576 = vmul.f32 %v512, %v559
    %v577 = vmul.f32 %v517, %v564
    %v578 = vmul.f32 %v520, %v569
    %579 = vset.pattern.permute.xlu0 1
    %580 = vperm.xlu0 %579, %v277
    %v581 = vpop.permute.xlu0 %580
    %583 = vset.pattern.permute.xlu0 1
    %584 = vperm.xlu0 %583, %v280
    %v585 = vpop.permute.xlu0 %584
    %587 = vset.pattern.permute.xlu0 1
    %588 = vperm.xlu0 %587, %v285
    %v589 = vpop.permute.xlu0 %588
    %591 = vset.pattern.permute.xlu0 1
    %592 = vperm.xlu0 %591, %v288
    %v593 = vpop.permute.xlu0 %592
    %595 = vset.pattern.permute.xlu0 1
    %596 = vperm.xlu0 %595, %v293
    %v597 = vpop.permute.xlu0 %596
    %599 = vset.pattern.permute.xlu0 1
    %600 = vperm.xlu0 %599, %v296
    %v601 = vpop.permute.xlu0 %600
    %603 = vset.pattern.permute.xlu0 1
    %604 = vperm.xlu0 %603, %v301
    %v605 = vpop.permute.xlu0 %604
    %607 = vset.pattern.permute.xlu0 1
    %608 = vperm.xlu0 %607, %v304
    %v609 = vpop.permute.xlu0 %608
    %v611 = vlaneseq
    %v612 = vshrl.u32 %v611, 7
    %v613 = vsub.s32 1, %v612
    %v614 = vrot.slane %v221, %v613
    %v615 = vadd.f32 %v581, %v614
    %v616 = vadd.f32 %v585, %v614
    %v617 = vadd.f32 %v589, %v614
    %v618 = vadd.f32 %v593, %v614
    %v619 = vadd.f32 %v597, %v614
    %v620 = vadd.f32 %v601, %v614
    %v621 = vadd.f32 %v605, %v614
    %v622 = vadd.f32 %v609, %v614
    %v623 = vmul.f32 %v615, 0.2
    %v624 = vmul.f32 %v616, 0.2
    %v625 = vmul.f32 %v617, 0.2
    %v626 = vmul.f32 %v618, 0.2
    %v627 = vmul.f32 %v619, 0.2
    %v628 = vmul.f32 %v620, 0.2
    %v629 = vmul.f32 %v621, 0.2
    %v630 = vmul.f32 %v622, 0.2
    %v631 = vmax.f32 %v615, %v623
    %v632 = vmax.f32 %v616, %v624
    %v633 = vmax.f32 %v617, %v625
    %v634 = vmax.f32 %v618, %v626
    %v635 = vmax.f32 %v619, %v627
    %v636 = vmax.f32 %v620, %v628
    %v637 = vmax.f32 %v621, %v629
    %v638 = vmax.f32 %v622, %v630
    %v639 = vadd.f32 %v631, %v46
    %v640 = vadd.f32 %v632, %v47
    %v641 = vadd.f32 %v633, %v48
    %v642 = vadd.f32 %v634, %v49
    %v643 = vadd.f32 %v635, %v50
    %v644 = vadd.f32 %v636, %v51
    %v645 = vadd.f32 %v637, %v52
    %v646 = vadd.f32 %v638, %v53
    %v647 = vsel %vm383, %v639, -inf
    %648 = vmax.xlane.f32.xlu0 %v647
    %v649 = vpop.xlane.xlu0 %648
    %v650 = vsel %vm383, %v640, -inf
    %651 = vmax.xlane.f32.xlu0 %v650
    %v652 = vpop.xlane.xlu0 %651
    %v653 = vsel %vm383, %v641, -inf
    %654 = vmax.xlane.f32.xlu0 %v653
    %v655 = vpop.xlane.xlu0 %654
    %v656 = vsel %vm383, %v642, -inf
    %657 = vmax.xlane.f32.xlu0 %v656
    %v658 = vpop.xlane.xlu0 %657
    %v659 = vsel %vm383, %v643, -inf
    %660 = vmax.xlane.f32.xlu0 %v659
    %v661 = vpop.xlane.xlu0 %660
    %v662 = vsel %vm383, %v644, -inf
    %663 = vmax.xlane.f32.xlu0 %v662
    %v664 = vpop.xlane.xlu0 %663
    %v665 = vsel %vm383, %v645, -inf
    %666 = vmax.xlane.f32.xlu0 %v665
    %v667 = vpop.xlane.xlu0 %666
    %v668 = vsel %vm383, %v646, -inf
    %669 = vmax.xlane.f32.xlu0 %v668
    %v670 = vpop.xlane.xlu0 %669
    %v671 = vsub.f32 %v639, %v649
    %v672 = vsub.f32 %v640, %v652
    %v673 = vsub.f32 %v641, %v655
    %v674 = vsub.f32 %v642, %v658
    %v675 = vsub.f32 %v643, %v661
    %v676 = vsub.f32 %v644, %v664
    %v677 = vsub.f32 %v645, %v667
    %v678 = vsub.f32 %v646, %v670
    %v679 = vmul.f32 %v671, 1.442695
    %v680 = vpow.pop %v679
    %v681 = vmul.f32 %v672, 1.442695
    %v682 = vpow.pop %v681
    %v683 = vmul.f32 %v673, 1.442695
    %v684 = vpow.pop %v683
    %v685 = vmul.f32 %v674, 1.442695
    %v686 = vpow.pop %v685
    %v687 = vmul.f32 %v675, 1.442695
    %v688 = vpow.pop %v687
    %v689 = vmul.f32 %v676, 1.442695
    %v690 = vpow.pop %v689
    %v691 = vmul.f32 %v677, 1.442695
    %v692 = vpow.pop %v691
    %v693 = vmul.f32 %v678, 1.442695
    %v694 = vpow.pop %v693
    %v695 = vpack.c.bf16 %v682, %v680
    %v696 = vpack.c.bf16 %v686, %v684
    %v697 = vpack.c.bf16 %v690, %v688
    %v698 = vpack.c.bf16 %v694, %v692
    %703 = vrot.lane.b32.xlu0 %v165, 112
    %v704 = vpop.permute.xlu0 %703
    %705 = vrot.lane.b32.xlu0 %v166, 112
    %v706 = vpop.permute.xlu0 %705
    %707 = vrot.lane.b32.xlu0 %v167, 112
    %v708 = vpop.permute.xlu0 %707
    %709 = vrot.lane.b32.xlu0 %v168, 112
    %v710 = vpop.permute.xlu0 %709
    %v712 = vsel %vm436, %v704, 1065369472
    %v715 = vsel %vm436, %v706, 1065369472
    %v718 = vsel %vm436, %v708, 1065369472
    %v721 = vsel %vm436, %v710, 1065369472
    %v724 = vsel %vm383, %v695, 0
    %v727 = vsel %vm383, %v696, 0
    %v730 = vsel %vm383, %v697, 0
    %v733 = vsel %vm383, %v698, 0
    %735 = vmatprep.subr.bf16.mxu0 0
    %736 = vmatpush1.bf16.msra.mxu0 %v712
    %737 = vmatprep.subr.bf16.mxu0 0
    %738 = vmatpush1.bf16.msra.mxu0 %v715
    %739 = vmatprep.subr.bf16.mxu0 0
    %740 = vmatpush1.bf16.msra.mxu0 %v718
    %741 = vmatprep.subr.bf16.mxu0 0
    %742 = vmatpush1.bf16.msra.mxu0 %v721
    %743 = vmatprep.subr.bf16.mxu0 0
    %744 = vmatpush1.bf16.msra.mxu0 0
    %745 = vmatprep.subr.bf16.mxu0 0
    %746 = vmatpush1.bf16.msra.mxu0 0
    %747 = vmatprep.subr.bf16.mxu0 0
    %748 = vmatpush1.bf16.msra.mxu0 0
    %749 = vmatprep.subr.bf16.mxu0 0
    %750 = vmatpush1.bf16.msra.mxu0 0
    %751 = vmatprep.subr.bf16.mxu0 0
    %752 = vmatpush1.bf16.msra.mxu0 0
    %753 = vmatprep.subr.bf16.mxu0 0
    %754 = vmatpush1.bf16.msra.mxu0 0
    %755 = vmatprep.subr.bf16.mxu0 0
    %756 = vmatpush1.bf16.msra.mxu0 0
    %757 = vmatprep.subr.bf16.mxu0 0
    %758 = vmatpush1.bf16.msra.mxu0 0
    %759 = vmatprep.subr.bf16.mxu0 0
    %760 = vmatpush1.bf16.msra.mxu0 0
    %761 = vmatprep.subr.bf16.mxu0 0
    %762 = vmatpush1.bf16.msra.mxu0 0
    %763 = vmatprep.subr.bf16.mxu0 0
    %764 = vmatpush1.bf16.msra.mxu0 0
    %765 = vmatprep.subr.bf16.mxu0 0
    %766 = vmatpush1.bf16.msra.mxu0 0
    %767 = vmatprep.mubr.bf16.mxu0 0
    %768 = vmatmul.mubr.bf16.gmra.mrb[0].mxu0 %v724
    %v769 = vpop.f32.mrb[0].mxu0
    %v770 = vadd.f32 0.0, %v769
    %v771 = vpop.f32.mrb[0].mxu0
    %v772 = vpop.f32.mrb[0].mxu0
    %v773 = vadd.f32 0.0, %v772
    %v774 = vpop.f32.mrb[0].mxu0
    %775 = vmatprep.mubr.bf16.mxu0 0
    %776 = vmatmul.mubr.bf16.gmra.mrb[0].mxu0 %v727
    %v777 = vpop.f32.mrb[0].mxu0
    %v778 = vadd.f32 0.0, %v777
    %v779 = vpop.f32.mrb[0].mxu0
    %v780 = vpop.f32.mrb[0].mxu0
    %v781 = vadd.f32 0.0, %v780
    %v782 = vpop.f32.mrb[0].mxu0
    %783 = vmatprep.mubr.bf16.mxu0 0
    %784 = vmatmul.mubr.bf16.gmra.mrb[0].mxu0 %v730
    %v785 = vpop.f32.mrb[0].mxu0
    %v786 = vadd.f32 0.0, %v785
    %v787 = vpop.f32.mrb[0].mxu0
    %v788 = vpop.f32.mrb[0].mxu0
    %v789 = vadd.f32 0.0, %v788
    %v790 = vpop.f32.mrb[0].mxu0
    %791 = vmatprep.mubr.bf16.mxu0 0
    %792 = vmatmul.mubr.bf16.gmra.mrb[0].mxu0 %v733
    %v793 = vpop.f32.mrb[0].mxu0
    %v794 = vadd.f32 0.0, %v793
    %v795 = vpop.f32.mrb[0].mxu0
    %v796 = vpop.f32.mrb[0].mxu0
    %v797 = vadd.f32 0.0, %v796
    %v798 = vpop.f32.mrb[0].mxu0
    %799 = vdwg.mxu0
    %v800 = vrcp.pop %v770
    %v801 = vrcp.pop %v773
    %v802 = vrcp.pop %v778
    %v803 = vrcp.pop %v781
    %v804 = vrcp.pop %v786
    %v805 = vrcp.pop %v789
    %v806 = vrcp.pop %v794
    %v807 = vrcp.pop %v797
    %809 = vset.pattern.permute.xlu0 16
    %810 = vperm.xlu0 %809, %v800
    %v811 = vpop.permute.xlu0 %810
    %814 = vset.pattern.permute.xlu0 16
    %815 = vperm.xlu0 %814, %v801
    %v816 = vpop.permute.xlu0 %815
    %819 = vset.pattern.permute.xlu0 16
    %820 = vperm.xlu0 %819, %v802
    %v821 = vpop.permute.xlu0 %820
    %824 = vset.pattern.permute.xlu0 16
    %825 = vperm.xlu0 %824, %v803
    %v826 = vpop.permute.xlu0 %825
    %829 = vset.pattern.permute.xlu0 16
    %830 = vperm.xlu0 %829, %v804
    %v831 = vpop.permute.xlu0 %830
    %834 = vset.pattern.permute.xlu0 16
    %835 = vperm.xlu0 %834, %v805
    %v836 = vpop.permute.xlu0 %835
    %839 = vset.pattern.permute.xlu0 16
    %840 = vperm.xlu0 %839, %v806
    %v841 = vpop.permute.xlu0 %840
    %844 = vset.pattern.permute.xlu0 16
    %845 = vperm.xlu0 %844, %v807
    %v846 = vpop.permute.xlu0 %845
    %v848 = vmul.f32 %v770, %v811
    %v849 = vmul.f32 %v773, %v816
    %v850 = vmul.f32 %v778, %v821
    %v851 = vmul.f32 %v781, %v826
    %v852 = vmul.f32 %v786, %v831
    %v853 = vmul.f32 %v789, %v836
    %v854 = vmul.f32 %v794, %v841
    %v855 = vmul.f32 %v797, %v846
    %v856 = vld [vmem:[%s5] sm:$0x1]
    %865 = vrot.lane.b32.xlu0 %v848, 16
    %v866 = vpop.permute.xlu0 %865
    %867 = vrot.lane.b32.xlu0 %v849, 16
    %v868 = vpop.permute.xlu0 %867
    %869 = vrot.lane.b32.xlu0 %v850, 16
    %v870 = vpop.permute.xlu0 %869
    %871 = vrot.lane.b32.xlu0 %v851, 16
    %v872 = vpop.permute.xlu0 %871
    %873 = vrot.lane.b32.xlu0 %v852, 16
    %v874 = vpop.permute.xlu0 %873
    %875 = vrot.lane.b32.xlu0 %v853, 16
    %v876 = vpop.permute.xlu0 %875
    %877 = vrot.lane.b32.xlu0 %v854, 16
    %v878 = vpop.permute.xlu0 %877
    %879 = vrot.lane.b32.xlu0 %v855, 16
    %v880 = vpop.permute.xlu0 %879
    %v889 = vsel %vm436, %v571, %v866
    %v890 = vsel %vm436, %v572, %v868
    %v891 = vsel %vm436, %v573, %v870
    %v892 = vsel %vm436, %v574, %v872
    %v893 = vsel %vm436, %v575, %v874
    %v894 = vsel %vm436, %v576, %v876
    %v895 = vsel %vm436, %v577, %v878
    %v896 = vsel %vm436, %v578, %v880
    %v898 = vlaneseq
    %v899 = vshrl.u32 %v898, 7
    %v900 = vsub.s32 0, %v899
    %v901 = vrot.slane %v856, %v900
    %v903 = vadd.f32 %v889, %v901
    %v904 = vadd.f32 %v890, %v901
    %v905 = vadd.f32 %v891, %v901
    %v906 = vadd.f32 %v892, %v901
    %v907 = vadd.f32 %v893, %v901
    %v908 = vadd.f32 %v894, %v901
    %v909 = vadd.f32 %v895, %v901
    %v910 = vadd.f32 %v896, %v901
    %vm911 = vcmp.gt.f32.partialorder %v903, 0.0
    %vm912 = vcmp.gt.f32.partialorder %v904, 0.0
    %vm913 = vcmp.gt.f32.partialorder %v905, 0.0
    %vm914 = vcmp.gt.f32.partialorder %v906, 0.0
    %vm915 = vcmp.gt.f32.partialorder %v907, 0.0
    %vm916 = vcmp.gt.f32.partialorder %v908, 0.0
    %vm917 = vcmp.gt.f32.partialorder %v909, 0.0
    %vm918 = vcmp.gt.f32.partialorder %v910, 0.0
    %v919 = vmin.f32 %v903, 0.0
    %v920 = vmin.f32 %v904, 0.0
    %v921 = vmin.f32 %v905, 0.0
    %v922 = vmin.f32 %v906, 0.0
    %v923 = vmin.f32 %v907, 0.0
    %v924 = vmin.f32 %v908, 0.0
    %v925 = vmin.f32 %v909, 0.0
    %v926 = vmin.f32 %v910, 0.0
    %v927 = vmul.f32 %v919, 1.442695
    %v928 = vpow.pop %v927
    %v929 = vmul.f32 %v920, 1.442695
    %v930 = vpow.pop %v929
    %v931 = vmul.f32 %v921, 1.442695
    %v932 = vpow.pop %v931
    %v933 = vmul.f32 %v922, 1.442695
    %v934 = vpow.pop %v933
    %v935 = vmul.f32 %v923, 1.442695
    %v936 = vpow.pop %v935
    %v937 = vmul.f32 %v924, 1.442695
    %v938 = vpow.pop %v937
    %v939 = vmul.f32 %v925, 1.442695
    %v940 = vpow.pop %v939
    %v941 = vmul.f32 %v926, 1.442695
    %v942 = vpow.pop %v941
    %v943 = vsub.f32 %v928, 1.0
    %v944 = vsub.f32 %v930, 1.0
    %v945 = vsub.f32 %v932, 1.0
    %v946 = vsub.f32 %v934, 1.0
    %v947 = vsub.f32 %v936, 1.0
    %v948 = vsub.f32 %v938, 1.0
    %v949 = vsub.f32 %v940, 1.0
    %v950 = vsub.f32 %v942, 1.0
    %v951 = vsel %vm911, %v903, %v943
    %v952 = vsel %vm912, %v904, %v944
    %v953 = vsel %vm913, %v905, %v945
    %v954 = vsel %vm914, %v906, %v946
    %v955 = vsel %vm915, %v907, %v947
    %v956 = vsel %vm916, %v908, %v948
    %v957 = vsel %vm917, %v909, %v949
    %v958 = vsel %vm918, %v910, %v950
    %v959 = vpack.c.bf16 %v952, %v951
    %v960 = vpack.c.bf16 %v954, %v953
    %v961 = vpack.c.bf16 %v956, %v955
    %v962 = vpack.c.bf16 %v958, %v957
    %v963 = vld [vmem:[%s6] sm:$0xf]
    %v964 = vld [vmem:[%s6 + $0x4] sm:$0xf]
    %v965 = vld [vmem:[%s6 + $0x8] sm:$0xf]
    %v966 = vld [vmem:[%s6 + $0xc] sm:$0xf]
    %v971 = vunpack.c.l.b16 %v963
    %v972 = vunpack.c.l.b16 %v964
    %v973 = vunpack.c.l.b16 %v965
    %v974 = vunpack.c.l.b16 %v966
    %v975 = vpack.c.b16 %v972, %v971
    %v976 = vpack.c.b16 %v974, %v973
    %v980 = vsel %vm170, %v959, 0
    %v983 = vsel %vm170, %v960, 0
    %v986 = vsel %vm170, %v961, 0
    %v989 = vsel %vm170, %v962, 0
    %991 = vmatprep.subr.bf16.mxu0 0
    %992 = vmatpush1.bf16.msra.mxu0 %v975
    %993 = vmatprep.subr.bf16.mxu0 0
    %994 = vmatpush1.bf16.msra.mxu0 %v976
    %995 = vmatprep.subr.bf16.mxu0 0
    %996 = vmatpush1.bf16.msra.mxu0 0
    %997 = vmatprep.subr.bf16.mxu0 0
    %998 = vmatpush1.bf16.msra.mxu0 0
    %999 = vmatprep.subr.bf16.mxu0 0
    %1000 = vmatpush1.bf16.msra.mxu0 0
    %1001 = vmatprep.subr.bf16.mxu0 0
    %1002 = vmatpush1.bf16.msra.mxu0 0
    %1003 = vmatprep.subr.bf16.mxu0 0
    %1004 = vmatpush1.bf16.msra.mxu0 0
    %1005 = vmatprep.subr.bf16.mxu0 0
    %1006 = vmatpush1.bf16.msra.mxu0 0
    %1007 = vmatprep.subr.bf16.mxu0 0
    %1008 = vmatpush1.bf16.msra.mxu0 0
    %1009 = vmatprep.subr.bf16.mxu0 0
    %1010 = vmatpush1.bf16.msra.mxu0 0
    %1011 = vmatprep.subr.bf16.mxu0 0
    %1012 = vmatpush1.bf16.msra.mxu0 0
    %1013 = vmatprep.subr.bf16.mxu0 0
    %1014 = vmatpush1.bf16.msra.mxu0 0
    %1015 = vmatprep.subr.bf16.mxu0 0
    %1016 = vmatpush1.bf16.msra.mxu0 0
    %1017 = vmatprep.subr.bf16.mxu0 0
    %1018 = vmatpush1.bf16.msra.mxu0 0
    %1019 = vmatprep.subr.bf16.mxu0 0
    %1020 = vmatpush1.bf16.msra.mxu0 0
    %1021 = vmatprep.subr.bf16.mxu0 0
    %1022 = vmatpush1.bf16.msra.mxu0 0
    %1023 = vmatprep.mubr.bf16.mxu0 0
    %1024 = vmatmul.mubr.bf16.gmra.mrb[0].mxu0 %v980
    %v1025 = vpop.f32.mrb[0].mxu0
    %v1026 = vadd.f32 0.0, %v1025
    %v1027 = vpop.f32.mrb[0].mxu0
    %v1028 = vpop.f32.mrb[0].mxu0
    %v1029 = vadd.f32 0.0, %v1028
    %v1030 = vpop.f32.mrb[0].mxu0
    %1031 = vmatprep.mubr.bf16.mxu0 0
    %1032 = vmatmul.mubr.bf16.gmra.mrb[0].mxu0 %v983
    %v1033 = vpop.f32.mrb[0].mxu0
    %v1034 = vadd.f32 0.0, %v1033
    %v1035 = vpop.f32.mrb[0].mxu0
    %v1036 = vpop.f32.mrb[0].mxu0
    %v1037 = vadd.f32 0.0, %v1036
    %v1038 = vpop.f32.mrb[0].mxu0
    %1039 = vmatprep.mubr.bf16.mxu0 0
    %1040 = vmatmul.mubr.bf16.gmra.mrb[0].mxu0 %v986
    %v1041 = vpop.f32.mrb[0].mxu0
    %v1042 = vadd.f32 0.0, %v1041
    %v1043 = vpop.f32.mrb[0].mxu0
    %v1044 = vpop.f32.mrb[0].mxu0
    %v1045 = vadd.f32 0.0, %v1044
    %v1046 = vpop.f32.mrb[0].mxu0
    %1047 = vmatprep.mubr.bf16.mxu0 0
    %1048 = vmatmul.mubr.bf16.gmra.mrb[0].mxu0 %v989
    %v1049 = vpop.f32.mrb[0].mxu0
    %v1050 = vadd.f32 0.0, %v1049
    %v1051 = vpop.f32.mrb[0].mxu0
    %v1052 = vpop.f32.mrb[0].mxu0
    %v1053 = vadd.f32 0.0, %v1052
    %v1054 = vpop.f32.mrb[0].mxu0
    %1055 = vdwg.mxu0
    %v1056 = vpack.c.bf16 %v1029, %v1026
    %v1057 = vpack.c.bf16 %v1037, %v1034
    %v1058 = vpack.c.bf16 %v1045, %v1042
    %v1059 = vpack.c.bf16 %v1053, %v1050
    %v1060 = vld [vmem:[%s7] sm:$0xf]
    %v1062 = vsel %vm436, %v1060, 0
    %v1065 = vsel %vm436, %v1056, 0
    %v1068 = vsel %vm436, %v1057, 0
    %v1071 = vsel %vm436, %v1058, 0
    %v1074 = vsel %vm436, %v1059, 0
    %1076 = vmatprep.subr.bf16.mxu0 0
    %1077 = vmatpush1.bf16.xpose.msra.mxu0 %v1065
    %1078 = vmatprep.subr.bf16.mxu0 0
    %1079 = vmatpush1.bf16.xpose.msra.mxu0 %v1068
    %1080 = vmatprep.subr.bf16.mxu0 0
    %1081 = vmatpush1.bf16.xpose.msra.mxu0 %v1071
    %1082 = vmatprep.subr.bf16.mxu0 0
    %1083 = vmatpush1.bf16.xpose.msra.mxu0 %v1074
    %1084 = vmatprep.subr.bf16.mxu0 0
    %1085 = vmatpush1.bf16.xpose.msra.mxu0 0
    %1086 = vmatprep.subr.bf16.mxu0 0
    %1087 = vmatpush1.bf16.xpose.msra.mxu0 0
    %1088 = vmatprep.subr.bf16.mxu0 0
    %1089 = vmatpush1.bf16.xpose.msra.mxu0 0
    %1090 = vmatprep.subr.bf16.mxu0 0
    %1091 = vmatpush1.bf16.xpose.msra.mxu0 0
    %1092 = vmatprep.subr.bf16.mxu0 0
    %1093 = vmatpush1.bf16.xpose.msra.mxu0 0
    %1094 = vmatprep.subr.bf16.mxu0 0
    %1095 = vmatpush1.bf16.xpose.msra.mxu0 0
    %1096 = vmatprep.subr.bf16.mxu0 0
    %1097 = vmatpush1.bf16.xpose.msra.mxu0 0
    %1098 = vmatprep.subr.bf16.mxu0 0
    %1099 = vmatpush1.bf16.xpose.msra.mxu0 0
    %1100 = vmatprep.subr.bf16.mxu0 0
    %1101 = vmatpush1.bf16.xpose.msra.mxu0 0
    %1102 = vmatprep.subr.bf16.mxu0 0
    %1103 = vmatpush1.bf16.xpose.msra.mxu0 0
    %1104 = vmatprep.subr.bf16.mxu0 0
    %1105 = vmatpush1.bf16.xpose.msra.mxu0 0
    %1106 = vmatprep.subr.bf16.mxu0 0
    %1107 = vmatpush1.bf16.xpose.msra.mxu0 0
    %1108 = vmatprep.mubr.bf16.mxu0 0
    %1109 = vmatmul.mubr.bf16.gmra.mrb[0].mxu0 %v1062
    %v1110 = vpop.f32.mrb[0].mxu0
    %v1111 = vadd.f32 0.0, %v1110
    %v1112 = vpop.f32.mrb[0].mxu0
    %v1113 = vpop.f32.mrb[0].mxu0
    %v1114 = vpop.f32.mrb[0].mxu0
    %1115 = vdwg.mxu0
    %v1116 = vld [vmem:[%s8] sm:$0xf]
    %v1117 = vld [vmem:[%s8 + $0x4] sm:$0xf]
    %v1120 = vunpack.c.l.b16 %v1116
    %v1121 = vunpack.c.l.b16 %v1117
    %v1122 = vpack.c.b16 %v1121, %v1120
    %1124 = vmatprep.subr.bf16.mxu0 0
    %1125 = vmatpush1.bf16.msra.mxu0 %v1122
    %1126 = vmatprep.subr.bf16.mxu0 0
    %1127 = vmatpush1.bf16.msra.mxu0 0
    %1128 = vmatprep.subr.bf16.mxu0 0
    %1129 = vmatpush1.bf16.msra.mxu0 0
    %1130 = vmatprep.subr.bf16.mxu0 0
    %1131 = vmatpush1.bf16.msra.mxu0 0
    %1132 = vmatprep.subr.bf16.mxu0 0
    %1133 = vmatpush1.bf16.msra.mxu0 0
    %1134 = vmatprep.subr.bf16.mxu0 0
    %1135 = vmatpush1.bf16.msra.mxu0 0
    %1136 = vmatprep.subr.bf16.mxu0 0
    %1137 = vmatpush1.bf16.msra.mxu0 0
    %1138 = vmatprep.subr.bf16.mxu0 0
    %1139 = vmatpush1.bf16.msra.mxu0 0
    %1140 = vmatprep.subr.bf16.mxu0 0
    %1141 = vmatpush1.bf16.msra.mxu0 0
    %1142 = vmatprep.subr.bf16.mxu0 0
    %1143 = vmatpush1.bf16.msra.mxu0 0
    %1144 = vmatprep.subr.bf16.mxu0 0
    %1145 = vmatpush1.bf16.msra.mxu0 0
    %1146 = vmatprep.subr.bf16.mxu0 0
    %1147 = vmatpush1.bf16.msra.mxu0 0
    %1148 = vmatprep.subr.bf16.mxu0 0
    %1149 = vmatpush1.bf16.msra.mxu0 0
    %1150 = vmatprep.subr.bf16.mxu0 0
    %1151 = vmatpush1.bf16.msra.mxu0 0
    %1152 = vmatprep.subr.bf16.mxu0 0
    %1153 = vmatpush1.bf16.msra.mxu0 0
    %1154 = vmatprep.subr.bf16.mxu0 0
    %1155 = vmatpush1.bf16.msra.mxu0 0
    %1156 = vmatprep.mubr.bf16.mxu0 0
    %1157 = vmatmul.mubr.bf16.gmra.mrb[0].mxu0 %v1065
    %v1158 = vpop.f32.mrb[0].mxu0
    %v1159 = vadd.f32 0.0, %v1158
    %v1160 = vpop.f32.mrb[0].mxu0
    %v1161 = vpop.f32.mrb[0].mxu0
    %v1162 = vadd.f32 0.0, %v1161
    %v1163 = vpop.f32.mrb[0].mxu0
    %1164 = vmatprep.mubr.bf16.mxu0 0
    %1165 = vmatmul.mubr.bf16.gmra.mrb[0].mxu0 %v1068
    %v1166 = vpop.f32.mrb[0].mxu0
    %v1167 = vadd.f32 0.0, %v1166
    %v1168 = vpop.f32.mrb[0].mxu0
    %v1169 = vpop.f32.mrb[0].mxu0
    %v1170 = vadd.f32 0.0, %v1169
    %v1171 = vpop.f32.mrb[0].mxu0
    %1172 = vmatprep.mubr.bf16.mxu0 0
    %1173 = vmatmul.mubr.bf16.gmra.mrb[0].mxu0 %v1071
    %v1174 = vpop.f32.mrb[0].mxu0
    %v1175 = vadd.f32 0.0, %v1174
    %v1176 = vpop.f32.mrb[0].mxu0
    %v1177 = vpop.f32.mrb[0].mxu0
    %v1178 = vadd.f32 0.0, %v1177
    %v1179 = vpop.f32.mrb[0].mxu0
    %1180 = vmatprep.mubr.bf16.mxu0 0
    %1181 = vmatmul.mubr.bf16.gmra.mrb[0].mxu0 %v1074
    %v1182 = vpop.f32.mrb[0].mxu0
    %v1183 = vadd.f32 0.0, %v1182
    %v1184 = vpop.f32.mrb[0].mxu0
    %v1185 = vpop.f32.mrb[0].mxu0
    %v1186 = vadd.f32 0.0, %v1185
    %v1187 = vpop.f32.mrb[0].mxu0
    %1188 = vdwg.mxu0
    %1190 = vset.pattern.permute.xlu0 0
    %1191 = vperm.xlu0 %1190, %v1159
    %v1192 = vpop.permute.xlu0 %1191
    %1195 = vset.pattern.permute.xlu0 0
    %1196 = vperm.xlu0 %1195, %v1162
    %v1197 = vpop.permute.xlu0 %1196
    %1200 = vset.pattern.permute.xlu0 0
    %1201 = vperm.xlu0 %1200, %v1167
    %v1202 = vpop.permute.xlu0 %1201
    %1205 = vset.pattern.permute.xlu0 0
    %1206 = vperm.xlu0 %1205, %v1170
    %v1207 = vpop.permute.xlu0 %1206
    %1210 = vset.pattern.permute.xlu0 0
    %1211 = vperm.xlu0 %1210, %v1175
    %v1212 = vpop.permute.xlu0 %1211
    %1215 = vset.pattern.permute.xlu0 0
    %1216 = vperm.xlu0 %1215, %v1178
    %v1217 = vpop.permute.xlu0 %1216
    %1220 = vset.pattern.permute.xlu0 0
    %1221 = vperm.xlu0 %1220, %v1183
    %v1222 = vpop.permute.xlu0 %1221
    %1225 = vset.pattern.permute.xlu0 0
    %1226 = vperm.xlu0 %1225, %v1186
    %v1227 = vpop.permute.xlu0 %1226
    %v1229 = vlaneseq
    %v1230 = vshrl.u32 %v1229, 7
    %v1231 = vsub.s32 0, %v1230
    %v1232 = vrot.slane %v1111, %v1231
    %v1233 = vadd.f32 %v1192, %v1232
    %v1234 = vadd.f32 %v1197, %v1232
    %v1235 = vadd.f32 %v1202, %v1232
    %v1236 = vadd.f32 %v1207, %v1232
    %v1237 = vadd.f32 %v1212, %v1232
    %v1238 = vadd.f32 %v1217, %v1232
    %v1239 = vadd.f32 %v1222, %v1232
    %v1240 = vadd.f32 %v1227, %v1232
    %v1241 = vmul.f32 %v1233, 0.2
    %v1242 = vmul.f32 %v1234, 0.2
    %v1243 = vmul.f32 %v1235, 0.2
    %v1244 = vmul.f32 %v1236, 0.2
    %v1245 = vmul.f32 %v1237, 0.2
    %v1246 = vmul.f32 %v1238, 0.2
    %v1247 = vmul.f32 %v1239, 0.2
    %v1248 = vmul.f32 %v1240, 0.2
    %v1249 = vmax.f32 %v1233, %v1241
    %v1250 = vmax.f32 %v1234, %v1242
    %v1251 = vmax.f32 %v1235, %v1243
    %v1252 = vmax.f32 %v1236, %v1244
    %v1253 = vmax.f32 %v1237, %v1245
    %v1254 = vmax.f32 %v1238, %v1246
    %v1255 = vmax.f32 %v1239, %v1247
    %v1256 = vmax.f32 %v1240, %v1248
    %v1257 = vadd.f32 %v1249, %v46
    %v1258 = vadd.f32 %v1250, %v47
    %v1259 = vadd.f32 %v1251, %v48
    %v1260 = vadd.f32 %v1252, %v49
    %v1261 = vadd.f32 %v1253, %v50
    %v1262 = vadd.f32 %v1254, %v51
    %v1263 = vadd.f32 %v1255, %v52
    %v1264 = vadd.f32 %v1256, %v53
    %v1265 = vsel %vm383, %v1257, -inf
    %1266 = vmax.xlane.f32.xlu0 %v1265
    %v1267 = vpop.xlane.xlu0 %1266
    %v1268 = vsel %vm383, %v1258, -inf
    %1269 = vmax.xlane.f32.xlu0 %v1268
    %v1270 = vpop.xlane.xlu0 %1269
    %v1271 = vsel %vm383, %v1259, -inf
    %1272 = vmax.xlane.f32.xlu0 %v1271
    %v1273 = vpop.xlane.xlu0 %1272
    %v1274 = vsel %vm383, %v1260, -inf
    %1275 = vmax.xlane.f32.xlu0 %v1274
    %v1276 = vpop.xlane.xlu0 %1275
    %v1277 = vsel %vm383, %v1261, -inf
    %1278 = vmax.xlane.f32.xlu0 %v1277
    %v1279 = vpop.xlane.xlu0 %1278
    %v1280 = vsel %vm383, %v1262, -inf
    %1281 = vmax.xlane.f32.xlu0 %v1280
    %v1282 = vpop.xlane.xlu0 %1281
    %v1283 = vsel %vm383, %v1263, -inf
    %1284 = vmax.xlane.f32.xlu0 %v1283
    %v1285 = vpop.xlane.xlu0 %1284
    %v1286 = vsel %vm383, %v1264, -inf
    %1287 = vmax.xlane.f32.xlu0 %v1286
    %v1288 = vpop.xlane.xlu0 %1287
    %v1289 = vsub.f32 %v1257, %v1267
    %v1290 = vsub.f32 %v1258, %v1270
    %v1291 = vsub.f32 %v1259, %v1273
    %v1292 = vsub.f32 %v1260, %v1276
    %v1293 = vsub.f32 %v1261, %v1279
    %v1294 = vsub.f32 %v1262, %v1282
    %v1295 = vsub.f32 %v1263, %v1285
    %v1296 = vsub.f32 %v1264, %v1288
    %v1297 = vmul.f32 %v1289, 1.442695
    %v1298 = vpow.pop %v1297
    %v1299 = vmul.f32 %v1290, 1.442695
    %v1300 = vpow.pop %v1299
    %v1301 = vmul.f32 %v1291, 1.442695
    %v1302 = vpow.pop %v1301
    %v1303 = vmul.f32 %v1292, 1.442695
    %v1304 = vpow.pop %v1303
    %v1305 = vmul.f32 %v1293, 1.442695
    %v1306 = vpow.pop %v1305
    %v1307 = vmul.f32 %v1294, 1.442695
    %v1308 = vpow.pop %v1307
    %v1309 = vmul.f32 %v1295, 1.442695
    %v1310 = vpow.pop %v1309
    %v1311 = vmul.f32 %v1296, 1.442695
    %v1312 = vpow.pop %v1311
    %v1313 = vpack.c.bf16 %v1300, %v1298
    %v1314 = vpack.c.bf16 %v1304, %v1302
    %v1315 = vpack.c.bf16 %v1308, %v1306
    %v1316 = vpack.c.bf16 %v1312, %v1310
    %v1317 = vsel %vm83, %v1056, 1065369472
    %v1319 = vsel %vm83, %v1057, 1065369472
    %v1321 = vsel %vm83, %v1058, 1065369472
    %v1323 = vsel %vm83, %v1059, 1065369472
    %v1326 = vsel %vm383, %v1313, 0
    %v1329 = vsel %vm383, %v1314, 0
    %v1332 = vsel %vm383, %v1315, 0
    %v1335 = vsel %vm383, %v1316, 0
    %1337 = vmatprep.subr.bf16.mxu0 0
    %1338 = vmatpush1.bf16.msra.mxu0 %v1317
    %1339 = vmatprep.subr.bf16.mxu0 0
    %1340 = vmatpush1.bf16.msra.mxu0 %v1319
    %1341 = vmatprep.subr.bf16.mxu0 0
    %1342 = vmatpush1.bf16.msra.mxu0 %v1321
    %1343 = vmatprep.subr.bf16.mxu0 0
    %1344 = vmatpush1.bf16.msra.mxu0 %v1323
    %1345 = vmatprep.subr.bf16.mxu0 0
    %1346 = vmatpush1.bf16.msra.mxu0 0
    %1347 = vmatprep.subr.bf16.mxu0 0
    %1348 = vmatpush1.bf16.msra.mxu0 0
    %1349 = vmatprep.subr.bf16.mxu0 0
    %1350 = vmatpush1.bf16.msra.mxu0 0
    %1351 = vmatprep.subr.bf16.mxu0 0
    %1352 = vmatpush1.bf16.msra.mxu0 0
    %1353 = vmatprep.subr.bf16.mxu0 0
    %1354 = vmatpush1.bf16.msra.mxu0 0
    %1355 = vmatprep.subr.bf16.mxu0 0
    %1356 = vmatpush1.bf16.msra.mxu0 0
    %1357 = vmatprep.subr.bf16.mxu0 0
    %1358 = vmatpush1.bf16.msra.mxu0 0
    %1359 = vmatprep.subr.bf16.mxu0 0
    %1360 = vmatpush1.bf16.msra.mxu0 0
    %1361 = vmatprep.subr.bf16.mxu0 0
    %1362 = vmatpush1.bf16.msra.mxu0 0
    %1363 = vmatprep.subr.bf16.mxu0 0
    %1364 = vmatpush1.bf16.msra.mxu0 0
    %1365 = vmatprep.subr.bf16.mxu0 0
    %1366 = vmatpush1.bf16.msra.mxu0 0
    %1367 = vmatprep.subr.bf16.mxu0 0
    %1368 = vmatpush1.bf16.msra.mxu0 0
    %1369 = vmatprep.mubr.bf16.mxu0 0
    %1370 = vmatmul.mubr.bf16.gmra.mrb[0].mxu0 %v1326
    %v1371 = vpop.f32.mrb[0].mxu0
    %v1372 = vadd.f32 0.0, %v1371
    %v1373 = vpop.f32.mrb[0].mxu0
    %v1374 = vpop.f32.mrb[0].mxu0
    %v1375 = vadd.f32 0.0, %v1374
    %v1376 = vpop.f32.mrb[0].mxu0
    %1377 = vmatprep.mubr.bf16.mxu0 0
    %1378 = vmatmul.mubr.bf16.gmra.mrb[0].mxu0 %v1329
    %v1379 = vpop.f32.mrb[0].mxu0
    %v1380 = vadd.f32 0.0, %v1379
    %v1381 = vpop.f32.mrb[0].mxu0
    %v1382 = vpop.f32.mrb[0].mxu0
    %v1383 = vadd.f32 0.0, %v1382
    %v1384 = vpop.f32.mrb[0].mxu0
    %1385 = vmatprep.mubr.bf16.mxu0 0
    %1386 = vmatmul.mubr.bf16.gmra.mrb[0].mxu0 %v1332
    %v1387 = vpop.f32.mrb[0].mxu0
    %v1388 = vadd.f32 0.0, %v1387
    %v1389 = vpop.f32.mrb[0].mxu0
    %v1390 = vpop.f32.mrb[0].mxu0
    %v1391 = vadd.f32 0.0, %v1390
    %v1392 = vpop.f32.mrb[0].mxu0
    %1393 = vmatprep.mubr.bf16.mxu0 0
    %1394 = vmatmul.mubr.bf16.gmra.mrb[0].mxu0 %v1335
    %v1395 = vpop.f32.mrb[0].mxu0
    %v1396 = vadd.f32 0.0, %v1395
    %v1397 = vpop.f32.mrb[0].mxu0
    %v1398 = vpop.f32.mrb[0].mxu0
    %v1399 = vadd.f32 0.0, %v1398
    %v1400 = vpop.f32.mrb[0].mxu0
    %1401 = vdwg.mxu0
    %v1402 = vrcp.pop %v1372
    %v1403 = vrcp.pop %v1375
    %v1404 = vrcp.pop %v1380
    %v1405 = vrcp.pop %v1383
    %v1406 = vrcp.pop %v1388
    %v1407 = vrcp.pop %v1391
    %v1408 = vrcp.pop %v1396
    %v1409 = vrcp.pop %v1399
    %1411 = vset.pattern.permute.xlu0 8
    %1412 = vperm.xlu0 %1411, %v1402
    %v1413 = vpop.permute.xlu0 %1412
    %1416 = vset.pattern.permute.xlu0 8
    %1417 = vperm.xlu0 %1416, %v1403
    %v1418 = vpop.permute.xlu0 %1417
    %1421 = vset.pattern.permute.xlu0 8
    %1422 = vperm.xlu0 %1421, %v1404
    %v1423 = vpop.permute.xlu0 %1422
    %1426 = vset.pattern.permute.xlu0 8
    %1427 = vperm.xlu0 %1426, %v1405
    %v1428 = vpop.permute.xlu0 %1427
    %1431 = vset.pattern.permute.xlu0 8
    %1432 = vperm.xlu0 %1431, %v1406
    %v1433 = vpop.permute.xlu0 %1432
    %1436 = vset.pattern.permute.xlu0 8
    %1437 = vperm.xlu0 %1436, %v1407
    %v1438 = vpop.permute.xlu0 %1437
    %1441 = vset.pattern.permute.xlu0 8
    %1442 = vperm.xlu0 %1441, %v1408
    %v1443 = vpop.permute.xlu0 %1442
    %1446 = vset.pattern.permute.xlu0 8
    %1447 = vperm.xlu0 %1446, %v1409
    %v1448 = vpop.permute.xlu0 %1447
    %v1450 = vmul.f32 %v1372, %v1413
    %v1451 = vmul.f32 %v1375, %v1418
    %v1452 = vmul.f32 %v1380, %v1423
    %v1453 = vmul.f32 %v1383, %v1428
    %v1454 = vmul.f32 %v1388, %v1433
    %v1455 = vmul.f32 %v1391, %v1438
    %v1456 = vmul.f32 %v1396, %v1443
    %v1457 = vmul.f32 %v1399, %v1448
    %1458 = vset.pattern.permute.xlu0 1
    %1459 = vperm.xlu0 %1458, %v1159
    %v1460 = vpop.permute.xlu0 %1459
    %1462 = vset.pattern.permute.xlu0 1
    %1463 = vperm.xlu0 %1462, %v1162
    %v1464 = vpop.permute.xlu0 %1463
    %1466 = vset.pattern.permute.xlu0 1
    %1467 = vperm.xlu0 %1466, %v1167
    %v1468 = vpop.permute.xlu0 %1467
    %1470 = vset.pattern.permute.xlu0 1
    %1471 = vperm.xlu0 %1470, %v1170
    %v1472 = vpop.permute.xlu0 %1471
    %1474 = vset.pattern.permute.xlu0 1
    %1475 = vperm.xlu0 %1474, %v1175
    %v1476 = vpop.permute.xlu0 %1475
    %1478 = vset.pattern.permute.xlu0 1
    %1479 = vperm.xlu0 %1478, %v1178
    %v1480 = vpop.permute.xlu0 %1479
    %1482 = vset.pattern.permute.xlu0 1
    %1483 = vperm.xlu0 %1482, %v1183
    %v1484 = vpop.permute.xlu0 %1483
    %1486 = vset.pattern.permute.xlu0 1
    %1487 = vperm.xlu0 %1486, %v1186
    %v1488 = vpop.permute.xlu0 %1487
    %v1490 = vlaneseq
    %v1491 = vshrl.u32 %v1490, 7
    %v1492 = vsub.s32 1, %v1491
    %v1493 = vrot.slane %v1111, %v1492
    %v1494 = vadd.f32 %v1460, %v1493
    %v1495 = vadd.f32 %v1464, %v1493
    %v1496 = vadd.f32 %v1468, %v1493
    %v1497 = vadd.f32 %v1472, %v1493
    %v1498 = vadd.f32 %v1476, %v1493
    %v1499 = vadd.f32 %v1480, %v1493
    %v1500 = vadd.f32 %v1484, %v1493
    %v1501 = vadd.f32 %v1488, %v1493
    %v1502 = vmul.f32 %v1494, 0.2
    %v1503 = vmul.f32 %v1495, 0.2
    %v1504 = vmul.f32 %v1496, 0.2
    %v1505 = vmul.f32 %v1497, 0.2
    %v1506 = vmul.f32 %v1498, 0.2
    %v1507 = vmul.f32 %v1499, 0.2
    %v1508 = vmul.f32 %v1500, 0.2
    %v1509 = vmul.f32 %v1501, 0.2
    %v1510 = vmax.f32 %v1494, %v1502
    %v1511 = vmax.f32 %v1495, %v1503
    %v1512 = vmax.f32 %v1496, %v1504
    %v1513 = vmax.f32 %v1497, %v1505
    %v1514 = vmax.f32 %v1498, %v1506
    %v1515 = vmax.f32 %v1499, %v1507
    %v1516 = vmax.f32 %v1500, %v1508
    %v1517 = vmax.f32 %v1501, %v1509
    %v1518 = vadd.f32 %v1510, %v46
    %v1519 = vadd.f32 %v1511, %v47
    %v1520 = vadd.f32 %v1512, %v48
    %v1521 = vadd.f32 %v1513, %v49
    %v1522 = vadd.f32 %v1514, %v50
    %v1523 = vadd.f32 %v1515, %v51
    %v1524 = vadd.f32 %v1516, %v52
    %v1525 = vadd.f32 %v1517, %v53
    %v1526 = vsel %vm383, %v1518, -inf
    %1527 = vmax.xlane.f32.xlu0 %v1526
    %v1528 = vpop.xlane.xlu0 %1527
    %v1529 = vsel %vm383, %v1519, -inf
    %1530 = vmax.xlane.f32.xlu0 %v1529
    %v1531 = vpop.xlane.xlu0 %1530
    %v1532 = vsel %vm383, %v1520, -inf
    %1533 = vmax.xlane.f32.xlu0 %v1532
    %v1534 = vpop.xlane.xlu0 %1533
    %v1535 = vsel %vm383, %v1521, -inf
    %1536 = vmax.xlane.f32.xlu0 %v1535
    %v1537 = vpop.xlane.xlu0 %1536
    %v1538 = vsel %vm383, %v1522, -inf
    %1539 = vmax.xlane.f32.xlu0 %v1538
    %v1540 = vpop.xlane.xlu0 %1539
    %v1541 = vsel %vm383, %v1523, -inf
    %1542 = vmax.xlane.f32.xlu0 %v1541
    %v1543 = vpop.xlane.xlu0 %1542
    %v1544 = vsel %vm383, %v1524, -inf
    %1545 = vmax.xlane.f32.xlu0 %v1544
    %v1546 = vpop.xlane.xlu0 %1545
    %v1547 = vsel %vm383, %v1525, -inf
    %1548 = vmax.xlane.f32.xlu0 %v1547
    %v1549 = vpop.xlane.xlu0 %1548
    %v1550 = vsub.f32 %v1518, %v1528
    %v1551 = vsub.f32 %v1519, %v1531
    %v1552 = vsub.f32 %v1520, %v1534
    %v1553 = vsub.f32 %v1521, %v1537
    %v1554 = vsub.f32 %v1522, %v1540
    %v1555 = vsub.f32 %v1523, %v1543
    %v1556 = vsub.f32 %v1524, %v1546
    %v1557 = vsub.f32 %v1525, %v1549
    %v1558 = vmul.f32 %v1550, 1.442695
    %v1559 = vpow.pop %v1558
    %v1560 = vmul.f32 %v1551, 1.442695
    %v1561 = vpow.pop %v1560
    %v1562 = vmul.f32 %v1552, 1.442695
    %v1563 = vpow.pop %v1562
    %v1564 = vmul.f32 %v1553, 1.442695
    %v1565 = vpow.pop %v1564
    %v1566 = vmul.f32 %v1554, 1.442695
    %v1567 = vpow.pop %v1566
    %v1568 = vmul.f32 %v1555, 1.442695
    %v1569 = vpow.pop %v1568
    %v1570 = vmul.f32 %v1556, 1.442695
    %v1571 = vpow.pop %v1570
    %v1572 = vmul.f32 %v1557, 1.442695
    %v1573 = vpow.pop %v1572
    %v1574 = vpack.c.bf16 %v1561, %v1559
    %v1575 = vpack.c.bf16 %v1565, %v1563
    %v1576 = vpack.c.bf16 %v1569, %v1567
    %v1577 = vpack.c.bf16 %v1573, %v1571
    %1582 = vrot.lane.b32.xlu0 %v1056, 120
    %v1583 = vpop.permute.xlu0 %1582
    %1584 = vrot.lane.b32.xlu0 %v1057, 120
    %v1585 = vpop.permute.xlu0 %1584
    %1586 = vrot.lane.b32.xlu0 %v1058, 120
    %v1587 = vpop.permute.xlu0 %1586
    %1588 = vrot.lane.b32.xlu0 %v1059, 120
    %v1589 = vpop.permute.xlu0 %1588
    %v1591 = vsel %vm83, %v1583, 1065369472
    %v1594 = vsel %vm83, %v1585, 1065369472
    %v1597 = vsel %vm83, %v1587, 1065369472
    %v1600 = vsel %vm83, %v1589, 1065369472
    %v1603 = vsel %vm383, %v1574, 0
    %v1606 = vsel %vm383, %v1575, 0
    %v1609 = vsel %vm383, %v1576, 0
    %v1612 = vsel %vm383, %v1577, 0
    %1614 = vmatprep.subr.bf16.mxu0 0
    %1615 = vmatpush1.bf16.msra.mxu0 %v1591
    %1616 = vmatprep.subr.bf16.mxu0 0
    %1617 = vmatpush1.bf16.msra.mxu0 %v1594
    %1618 = vmatprep.subr.bf16.mxu0 0
    %1619 = vmatpush1.bf16.msra.mxu0 %v1597
    %1620 = vmatprep.subr.bf16.mxu0 0
    %1621 = vmatpush1.bf16.msra.mxu0 %v1600
    %1622 = vmatprep.subr.bf16.mxu0 0
    %1623 = vmatpush1.bf16.msra.mxu0 0
    %1624 = vmatprep.subr.bf16.mxu0 0
    %1625 = vmatpush1.bf16.msra.mxu0 0
    %1626 = vmatprep.subr.bf16.mxu0 0
    %1627 = vmatpush1.bf16.msra.mxu0 0
    %1628 = vmatprep.subr.bf16.mxu0 0
    %1629 = vmatpush1.bf16.msra.mxu0 0
    %1630 = vmatprep.subr.bf16.mxu0 0
    %1631 = vmatpush1.bf16.msra.mxu0 0
    %1632 = vmatprep.subr.bf16.mxu0 0
    %1633 = vmatpush1.bf16.msra.mxu0 0
    %1634 = vmatprep.subr.bf16.mxu0 0
    %1635 = vmatpush1.bf16.msra.mxu0 0
    %1636 = vmatprep.subr.bf16.mxu0 0
    %1637 = vmatpush1.bf16.msra.mxu0 0
    %1638 = vmatprep.subr.bf16.mxu0 0
    %1639 = vmatpush1.bf16.msra.mxu0 0
    %1640 = vmatprep.subr.bf16.mxu0 0
    %1641 = vmatpush1.bf16.msra.mxu0 0
    %1642 = vmatprep.subr.bf16.mxu0 0
    %1643 = vmatpush1.bf16.msra.mxu0 0
    %1644 = vmatprep.subr.bf16.mxu0 0
    %1645 = vmatpush1.bf16.msra.mxu0 0
    %1646 = vmatprep.mubr.bf16.mxu0 0
    %1647 = vmatmul.mubr.bf16.gmra.mrb[0].mxu0 %v1603
    %v1648 = vpop.f32.mrb[0].mxu0
    %v1649 = vadd.f32 0.0, %v1648
    %v1650 = vpop.f32.mrb[0].mxu0
    %v1651 = vpop.f32.mrb[0].mxu0
    %v1652 = vadd.f32 0.0, %v1651
    %v1653 = vpop.f32.mrb[0].mxu0
    %1654 = vmatprep.mubr.bf16.mxu0 0
    %1655 = vmatmul.mubr.bf16.gmra.mrb[0].mxu0 %v1606
    %v1656 = vpop.f32.mrb[0].mxu0
    %v1657 = vadd.f32 0.0, %v1656
    %v1658 = vpop.f32.mrb[0].mxu0
    %v1659 = vpop.f32.mrb[0].mxu0
    %v1660 = vadd.f32 0.0, %v1659
    %v1661 = vpop.f32.mrb[0].mxu0
    %1662 = vmatprep.mubr.bf16.mxu0 0
    %1663 = vmatmul.mubr.bf16.gmra.mrb[0].mxu0 %v1609
    %v1664 = vpop.f32.mrb[0].mxu0
    %v1665 = vadd.f32 0.0, %v1664
    %v1666 = vpop.f32.mrb[0].mxu0
    %v1667 = vpop.f32.mrb[0].mxu0
    %v1668 = vadd.f32 0.0, %v1667
    %v1669 = vpop.f32.mrb[0].mxu0
    %1670 = vmatprep.mubr.bf16.mxu0 0
    %1671 = vmatmul.mubr.bf16.gmra.mrb[0].mxu0 %v1612
    %v1672 = vpop.f32.mrb[0].mxu0
    %v1673 = vadd.f32 0.0, %v1672
    %v1674 = vpop.f32.mrb[0].mxu0
    %v1675 = vpop.f32.mrb[0].mxu0
    %v1676 = vadd.f32 0.0, %v1675
    %v1677 = vpop.f32.mrb[0].mxu0
    %1678 = vdwg.mxu0
    %v1679 = vrcp.pop %v1649
    %v1680 = vrcp.pop %v1652
    %v1681 = vrcp.pop %v1657
    %v1682 = vrcp.pop %v1660
    %v1683 = vrcp.pop %v1665
    %v1684 = vrcp.pop %v1668
    %v1685 = vrcp.pop %v1673
    %v1686 = vrcp.pop %v1676
    %1688 = vset.pattern.permute.xlu0 8
    %1689 = vperm.xlu0 %1688, %v1679
    %v1690 = vpop.permute.xlu0 %1689
    %1693 = vset.pattern.permute.xlu0 8
    %1694 = vperm.xlu0 %1693, %v1680
    %v1695 = vpop.permute.xlu0 %1694
    %1698 = vset.pattern.permute.xlu0 8
    %1699 = vperm.xlu0 %1698, %v1681
    %v1700 = vpop.permute.xlu0 %1699
    %1703 = vset.pattern.permute.xlu0 8
    %1704 = vperm.xlu0 %1703, %v1682
    %v1705 = vpop.permute.xlu0 %1704
    %1708 = vset.pattern.permute.xlu0 8
    %1709 = vperm.xlu0 %1708, %v1683
    %v1710 = vpop.permute.xlu0 %1709
    %1713 = vset.pattern.permute.xlu0 8
    %1714 = vperm.xlu0 %1713, %v1684
    %v1715 = vpop.permute.xlu0 %1714
    %1718 = vset.pattern.permute.xlu0 8
    %1719 = vperm.xlu0 %1718, %v1685
    %v1720 = vpop.permute.xlu0 %1719
    %1723 = vset.pattern.permute.xlu0 8
    %1724 = vperm.xlu0 %1723, %v1686
    %v1725 = vpop.permute.xlu0 %1724
    %v1727 = vmul.f32 %v1649, %v1690
    %v1728 = vmul.f32 %v1652, %v1695
    %v1729 = vmul.f32 %v1657, %v1700
    %v1730 = vmul.f32 %v1660, %v1705
    %v1731 = vmul.f32 %v1665, %v1710
    %v1732 = vmul.f32 %v1668, %v1715
    %v1733 = vmul.f32 %v1673, %v1720
    %v1734 = vmul.f32 %v1676, %v1725
    %v1735 = vld [vmem:[%s9] sm:$0x1]
    %v1736 = vadd.f32 %v1450, %v1727
    %v1737 = vadd.f32 %v1451, %v1728
    %v1738 = vadd.f32 %v1452, %v1729
    %v1739 = vadd.f32 %v1453, %v1730
    %v1740 = vadd.f32 %v1454, %v1731
    %v1741 = vadd.f32 %v1455, %v1732
    %v1742 = vadd.f32 %v1456, %v1733
    %v1743 = vadd.f32 %v1457, %v1734
    %v1744 = vmul.f32 %v1736, 0.5
    %v1745 = vmul.f32 %v1737, 0.5
    %v1746 = vmul.f32 %v1738, 0.5
    %v1747 = vmul.f32 %v1739, 0.5
    %v1748 = vmul.f32 %v1740, 0.5
    %v1749 = vmul.f32 %v1741, 0.5
    %v1750 = vmul.f32 %v1742, 0.5
    %v1751 = vmul.f32 %v1743, 0.5
    %v1753 = vlaneseq
    %v1754 = vshrl.u32 %v1753, 7
    %v1755 = vsub.s32 0, %v1754
    %v1756 = vrot.slane %v1735, %v1755
    %v1758 = vadd.f32 %v1744, %v1756
    %v1759 = vadd.f32 %v1745, %v1756
    %v1760 = vadd.f32 %v1746, %v1756
    %v1761 = vadd.f32 %v1747, %v1756
    %v1762 = vadd.f32 %v1748, %v1756
    %v1763 = vadd.f32 %v1749, %v1756
    %v1764 = vadd.f32 %v1750, %v1756
    %v1765 = vadd.f32 %v1751, %v1756
    %v1766 = vsel %vm83, %v1758, 0.0
    %v1767 = vsel %vm83, %v1759, 0.0
    %v1768 = vsel %vm83, %v1760, 0.0
    %v1769 = vsel %vm83, %v1761, 0.0
    %v1770 = vsel %vm83, %v1762, 0.0
    %v1771 = vsel %vm83, %v1763, 0.0
    %v1772 = vsel %vm83, %v1764, 0.0
    %v1773 = vsel %vm83, %v1765, 0.0
    %1774 = vst [vmem:[#allocation2] sm:$0xff] %v1766
    %1775 = vst [vmem:[#allocation2 + $0x8] sm:$0xff] %v1767
    %1776 = vst [vmem:[#allocation2 + $0x10] sm:$0xff] %v1768
    %1777 = vst [vmem:[#allocation2 + $0x18] sm:$0xff] %v1769
    %1778 = vst [vmem:[#allocation2 + $0x20] sm:$0xff] %v1770
    %1779 = vst [vmem:[#allocation2 + $0x28] sm:$0xff] %v1771
    %1780 = vst [vmem:[#allocation2 + $0x30] sm:$0xff] %v1772
    %1781 = vst [vmem:[#allocation2 + $0x38] sm:$0xff] %v1773
    // Predicated region
    $region42: #{tpu_custom_call.1} parent=1 // pred_check
      _
    $region43: #{tpu_custom_call.1} parent=1 // pred_check_branch
      %1783 = sbr.rel (0) target = $region45
    $region44: #{tpu_custom_call.1} parent=1 // pred_region
      %s1785 = ssub.s32 1024, 1024
      %1786 = vsyncadd [#allocation3], %s1785
      %s1787 = sshll.u32 [#allocation2], 4
      %s1788 = int_to_ptr.vmem [resolvable:$true] %s1787
      %1793 = dma.vmem_to_hbm [thread:$0]  %s1788, 1024, %s10, [#allocation3], 128, 128, 8
    $region45: #{tpu_custom_call.1} parent=1 // pred_fallthru
      _
    // Predicated region
    $region46: #{tpu_custom_call.1} parent=1 // pred_check
      _
    $region47: #{tpu_custom_call.1} parent=1 // pred_check_branch
      %1795 = sbr.rel (0) target = $region49
    $region48: #{tpu_custom_call.1} parent=1 // pred_region
      %1796 = dma.done [#allocation3], 1024
    $region49: #{tpu_custom_call.1} parent=1 // pred_fallthru
      _
    %1797 = vsyncpa [#allocation3], 1

</llo_original>
